<compile_context>
chip_gen: v7x
topology: tpu7x:2x2x1
jax: 0.10.0
libtpu: 0.0.40
codegen_flags: <defaults>
</compile_context>

<pallas_src>
import numpy as np
import jax
import jax.numpy as jnp
from jax.experimental import pallas as pl
from jax.experimental.pallas import tpu as pltpu


def _round_up(v, m):
    return ((v + m - 1) // m) * m


def lift_block_kernel(xj_ref, sre_ref, sim_ref, tgt_ref, w_ref,
                      cph_ref, sph_ref, b_ref, out_ref):
    """Grid = (N_tiles, edge_tiles_per_N_tile).

    xj_ref : (TE, Cin)        gathered source features for this edge tile (compute dtype)
    sre/sim: (TE, R2)         real / imag stencil, f32
    tgt_ref: (1, 1, TE)       local (within N-tile) target row per edge, -1 for padding
    w_ref  : (R2, Cin, Cpad)  radial taps (compute dtype), channel axis padded to 128k
    cph/sph: (1, Cpad)        cos / sin of per-channel phase offsets (ftype=1), f32
    b_ref  : (1, Cpad)        TangentNonLin magnitude bias, f32
    out_ref: (TN, 2*Cpad)     packed [re | im] accumulator / final output, f32
    """
    t = pl.program_id(1)
    TE, _ = xj_ref.shape
    R2 = sre_ref.shape[1]
    TN, C2 = out_ref.shape
    Cpad = C2 // 2
    cdt = xj_ref.dtype
    approx = bool(cdt == jnp.bfloat16)

    @pl.when(t == 0)
    def _init():
        out_ref[...] = jnp.zeros_like(out_ref)

    # ---- per-edge messages: R2 small MXU matmuls scaled by the stencil columns ----
    xj = xj_ref[...]                               # (TE, Cin)
    sre = sre_ref[...]                             # (TE, R2) f32
    sim = sim_ref[...]
    msg_re = jnp.zeros((TE, Cpad), jnp.float32)
    msg_im = jnp.zeros((TE, Cpad), jnp.float32)
    for k in range(R2):                            # static unroll, R2 is small
        tk = jnp.dot(xj, w_ref[k], preferred_element_type=jnp.float32)   # (TE, Cpad)
        msg_re = msg_re + sre[:, k:k + 1] * tk
        msg_im = msg_im + sim[:, k:k + 1] * tk

    # pack re | im along lanes -> one lane-dense (TE, 2*Cpad) message matrix
    msg = jnp.concatenate([msg_re, msg_im], axis=1)

    # ---- scatter-add into this target tile via an in-register one-hot + MXU -------
    tloc = tgt_ref[0]                              # (1, TE) int32, -1 = padded edge
    rows = jax.lax.broadcasted_iota(jnp.int32, (TN, TE), 0)
    onehot = (rows == tloc).astype(cdt)            # padded edges match no row
    out_ref[...] += jnp.dot(onehot, msg.astype(cdt),
                            preferred_element_type=jnp.float32)

    # ---- finalize: phase rotation (commutes with the sum) + modReLU ---------------
    @pl.when(t == pl.num_programs(1) - 1)
    def _finalize():
        acc = out_ref[...]
        y_re, y_im = acc[:, :Cpad], acc[:, Cpad:]
        cph, sph = cph_ref[...], sph_ref[...]
        r_re = y_re * cph - y_im * sph
        r_im = y_re * sph + y_im * cph
        mag = jnp.sqrt(r_re * r_re + r_im * r_im)
        inv = pl.reciprocal(mag + 1e-6, approx=approx)   # EUP slot, ~free
        scale = jnp.maximum(mag + b_ref[...], 0.0) * inv
        out_ref[...] = jnp.concatenate([r_re * scale, r_im * scale], axis=1)


def _plan_edge_tiles(tgt, n_blocks, tn, te):
    """Host-side, one-off per graph: sort edges by target, bucket by target
    row-tile, pad every bucket to the same number of edge tiles.
    Returns (edge_sel, tgt_local, t_max):
      edge_sel[k]  = original edge id feeding grouped slot k (-1 = padding)
      tgt_local    = (n_blocks*t_max, 1, te) target row within its N-tile (-1 = pad)
    """
    tgt = np.asarray(tgt, dtype=np.int64)
    order = np.argsort(tgt, kind="stable")
    tgt_sorted = tgt[order]
    counts = np.bincount(tgt_sorted // tn, minlength=n_blocks)
    t_max = max(1, int(-(-int(counts.max()) // te))) if tgt.size else 1
    cap = t_max * te
    edge_sel = np.full((n_blocks, cap), -1, dtype=np.int64)
    tgt_local = np.full((n_blocks, cap), -1, dtype=np.int32)
    start = 0
    for b in range(n_blocks):
        c = int(counts[b])
        edge_sel[b, :c] = order[start:start + c]
        tgt_local[b, :c] = tgt_sorted[start:start + c] - b * tn
        start += c
    return edge_sel.reshape(-1), tgt_local.reshape(n_blocks * t_max, 1, te), t_max


def lift_block_forward(x, supp_edges, lift_sten, w, phase, bias, *,
                       compute_dtype=jnp.bfloat16, edge_tile=64, n_tile=128):
    """Pallas-TPU forward of LiftBlock (TransField ftype=1 + TangentNonLin).

    x: (N, Cin) f32; supp_edges: (E, 2) int (j, i) source -> target;
    lift_sten: (E, R, 2) complex64; w: (Cin, R, 2, Cout) f32;
    phase: (Cout,) f32; bias: (Cout,) f32.  Returns (N, Cout) complex64.

    Edge bucketing/padding is data-dependent and done host-side (the edge
    structure is static per mesh), so don't jit this wrapper over supp_edges.
    """
    N, Cin = x.shape
    E, R, _ = lift_sten.shape
    Cout = w.shape[-1]
    R2 = 2 * R

    LANE, SUB = 128, 8
    Cpad = max(LANE, _round_up(Cout, LANE))                 # lane-dense channel axis
    TN = max(SUB, _round_up(min(n_tile, _round_up(N, SUB)), SUB))
    TE = max(16, _round_up(edge_tile, 16))                  # bf16 sublane-pack friendly
    N_pad = _round_up(N, TN)
    NB = N_pad // TN

    # ---- host-side planning: group edges by target row-tile ---------------------
    src_np = np.asarray(supp_edges[:, 0], dtype=np.int64)
    tgt_np = np.asarray(supp_edges[:, 1], dtype=np.int64)
    edge_sel, tgt_local, T_max = _plan_edge_tiles(tgt_np, NB, TN, TE)
    num_tiles = NB * T_max
    valid = edge_sel >= 0
    sel = np.where(valid, edge_sel, 0).astype(np.int32)
    src_g = np.where(valid, src_np[sel], 0).astype(np.int32)

    # ---- glue: cheap O(E) gathers / pads (no O(E*N) one-hot anywhere) -----------
    sel_j = jnp.asarray(sel)
    xj_g = x.astype(jnp.float32)[jnp.asarray(src_g)].astype(compute_dtype)   # (num_tiles*TE, Cin)
    sre_all = jnp.real(lift_sten).reshape(E, R2).astype(jnp.float32)
    sim_all = jnp.imag(lift_sten).reshape(E, R2).astype(jnp.float32)
    sre_g = sre_all[sel_j]                                                   # (num_tiles*TE, R2)
    sim_g = sim_all[sel_j]
    tgt_g = jnp.asarray(tgt_local, dtype=jnp.int32)                          # (num_tiles, 1, TE)

    w_p = jnp.zeros((R2, Cin, Cpad), jnp.float32)
    w_p = w_p.at[:, :, :Cout].set(
        jnp.transpose(w.reshape(Cin, R2, Cout).astype(jnp.float32), (1, 0, 2)))
    w_p = w_p.astype(compute_dtype)
    cos_ph = jnp.zeros((1, Cpad), jnp.float32).at[0, :Cout].set(jnp.cos(phase))
    sin_ph = jnp.zeros((1, Cpad), jnp.float32).at[0, :Cout].set(jnp.sin(phase))
    b_p = jnp.zeros((1, Cpad), jnp.float32).at[0, :Cout].set(bias)

    # ---- pallas_call -------------------------------------------------------------
    edge_map = lambda b, t: (b * T_max + t, 0)
    in_specs = [
        pl.BlockSpec((TE, Cin), edge_map),                              # gathered x[j]
        pl.BlockSpec((TE, R2), edge_map),                               # stencil (re)
        pl.BlockSpec((TE, R2), edge_map),                               # stencil (im)
        pl.BlockSpec((1, 1, TE), lambda b, t: (b * T_max + t, 0, 0)),   # local target ids
        pl.BlockSpec((R2, Cin, Cpad), lambda b, t: (0, 0, 0)),          # W (resident)
        pl.BlockSpec((1, Cpad), lambda b, t: (0, 0)),                   # cos(phase)
        pl.BlockSpec((1, Cpad), lambda b, t: (0, 0)),                   # sin(phase)
        pl.BlockSpec((1, Cpad), lambda b, t: (0, 0)),                   # nonlin bias
    ]
    out_spec = pl.BlockSpec((TN, 2 * Cpad), lambda b, t: (b, 0))        # accumulator over t

    inputs = (xj_g, sre_g, sim_g, tgt_g, w_p, cos_ph, sin_ph, b_p)
    flops = (2 * num_tiles * TE * Cin * Cpad * R2          # message matmuls
             + 4 * num_tiles * TE * Cpad * R2              # stencil scale-accumulate
             + 2 * num_tiles * TE * TN * 2 * Cpad          # scatter matmuls
             + 12 * N_pad * Cpad)                          # epilogue
    bytes_accessed = int(sum(int(np.prod(a.shape)) * a.dtype.itemsize for a in inputs)
                         + N_pad * 2 * Cpad * 4)
    cost = pl.CostEstimate(flops=int(flops),
                           transcendentals=int(2 * N_pad * Cpad),
                           bytes_accessed=bytes_accessed)

    out = pl.pallas_call(
        lift_block_kernel,
        grid=(NB, T_max),
        in_specs=in_specs,
        out_specs=out_spec,
        out_shape=jax.ShapeDtypeStruct((N_pad, 2 * Cpad), jnp.float32),
        compiler_params=pltpu.CompilerParams(
            dimension_semantics=("parallel", "arbitrary"),
            vmem_limit_bytes=32 * 1024 * 1024),
        cost_estimate=cost,
    )(*inputs)

    y = out[:N, :Cout] + 1j * out[:N, Cpad:Cpad + Cout]
    return y.astype(jnp.complex64)


def lift_block_reference(x, supp_edges, lift_sten, w, phase, bias):
    """Pure-JAX reference for validation."""
    src, tgt = supp_edges[:, 0], supp_edges[:, 1]
    xj = x[src]                                                     # (E, Cin)
    t = jnp.einsum('ec,crmo->ermo', xj, w).astype(jnp.complex64)    # (E, R, 2, Cout)
    msg = jnp.einsum('erm,ermo->eo', lift_sten, t)                  # (E, Cout)
    msg = msg * jnp.exp(1j * phase)[None, :]
    y = jnp.zeros((x.shape[0], w.shape[-1]), jnp.complex64).at[tgt].add(msg)
    mag = jnp.abs(y)
    scale = jnp.maximum(mag + bias[None, :], 0.0) / (mag + 1e-6)
    return y * scale


if __name__ == "__main__":
    # Small shapes consistent with the module's forward signature.
    N, Cin, Cout, R, E = 16, 4, 8, 6, 96

    key = jax.random.PRNGKey(0)
    k1, k2, k3, k4, k5, k6, k7 = jax.random.split(key, 7)

    x = jax.random.normal(k1, (N, Cin), jnp.float32)
    supp_edges = jax.random.randint(k2, (E, 2), 0, N, dtype=jnp.int32)
    rad = jax.random.uniform(k3, (E, R, 2), jnp.float32)
    ang = jax.random.uniform(k4, (E, R, 2), jnp.float32, 0.0, 2.0 * jnp.pi)
    lift_sten = (rad * jnp.exp(1j * ang)).astype(jnp.complex64)

    w = 0.1 * jax.random.normal(k5, (Cin, R, 2, Cout), jnp.float32)
    phase = jax.random.uniform(k6, (Cout,), jnp.float32, 0.0, 2.0 * jnp.pi)
    bias = 0.05 * jax.random.normal(k7, (Cout,), jnp.float32)

    y_ref = lift_block_reference(x, supp_edges, lift_sten, w, phase, bias)

    # Small tiles so the demo exercises the 2-D grid (2 N-tiles x >1 edge tiles)
    # and the cross-tile accumulator / finalize path.
    # f32 path: tight numerical check against the pure-JAX reference.
    y_f32 = lift_block_forward(x, supp_edges, lift_sten, w, phase, bias,
                               compute_dtype=jnp.float32, edge_tile=16, n_tile=8)
    jax.block_until_ready(y_f32)
    assert y_f32.shape == (N, Cout) and y_f32.dtype == jnp.complex64
    assert jnp.allclose(y_f32, y_ref, atol=1e-3, rtol=1e-3), "f32 mismatch vs JAX reference"

    # bf16 MXU path (default): tolerance bounded by bf16 rounding of x and W.
    y_bf16 = lift_block_forward(x, supp_edges, lift_sten, w, phase, bias,
                                edge_tile=16, n_tile=8)
    jax.block_until_ready(y_bf16)
    assert y_bf16.shape == (N, Cout) and y_bf16.dtype == jnp.complex64
    assert jnp.allclose(y_bf16, y_ref, atol=5e-2, rtol=5e-2), "bf16 mismatch vs JAX reference"

    print("KERNEL_OK")
</pallas_src>

<mosaic_0001>
module attributes {stable_mosaic.version = 11 : i64} {
  func.func @lift_block_kernel(%arg0: i32, %arg1: i32, %arg2: memref<16x4xf32, #tpu.memory_space<vmem>>, %arg3: memref<16x12xf32, #tpu.memory_space<vmem>>, %arg4: memref<16x12xf32, #tpu.memory_space<vmem>>, %arg5: memref<1x1x16xi32, #tpu.memory_space<vmem>>, %arg6: memref<12x4x128xf32, #tpu.memory_space<vmem>>, %arg7: memref<1x128xf32, #tpu.memory_space<vmem>>, %arg8: memref<1x128xf32, #tpu.memory_space<vmem>>, %arg9: memref<1x128xf32, #tpu.memory_space<vmem>>, %arg10: memref<8x256xf32, #tpu.memory_space<vmem>>) attributes {dimension_semantics = [#tpu.dimension_semantics<parallel>, #tpu.dimension_semantics<arbitrary>], iteration_bounds = array<i64: 2, 4>, scalar_prefetch = 0 : i64, scratch_operands = 0 : i64, tpu.core_type = #tpu.core_type<tc>, window_params = [{transform_indices = @transform_0, window_bounds = array<i64: 16, 4>}, {transform_indices = @transform_1, window_bounds = array<i64: 16, 12>}, {transform_indices = @transform_2, window_bounds = array<i64: 16, 12>}, {transform_indices = @transform_3, window_bounds = array<i64: 1, 1, 16>}, {pipeline_mode = #tpu.pipeline_mode<synchronous>, transform_indices = @transform_4, window_bounds = array<i64: 12, 4, 128>}, {pipeline_mode = #tpu.pipeline_mode<synchronous>, transform_indices = @transform_5, window_bounds = array<i64: 1, 128>}, {pipeline_mode = #tpu.pipeline_mode<synchronous>, transform_indices = @transform_6, window_bounds = array<i64: 1, 128>}, {pipeline_mode = #tpu.pipeline_mode<synchronous>, transform_indices = @transform_7, window_bounds = array<i64: 1, 128>}, {transform_indices = @transform_8, window_bounds = array<i64: 8, 256>}]} {
    %c0_i32 = arith.constant 0 : i32
    %0 = arith.cmpi eq, %arg1, %c0_i32 : i32
    %1 = arith.extui %0 : i1 to i32
    %c0_i32_0 = arith.constant 0 : i32
    %2 = arith.cmpi ne, %1, %c0_i32_0 : i32
    scf.if %2 {
      %cst_53 = arith.constant 0.000000e+00 : f32
      %155 = vector.broadcast %cst_53 : f32 to vector<8x256xf32>
      %c0_54 = arith.constant 0 : index
      %c0_55 = arith.constant 0 : index
      %156 = vector.load %arg10[%c0_54, %c0_55] : memref<8x256xf32, #tpu.memory_space<vmem>>, vector<8x256xf32>
      tpu.vector_store %arg10[%c0_54, %c0_55], %155 {strides = array<i32>} : memref<8x256xf32, #tpu.memory_space<vmem>>, vector<8x256xf32>,
    } else {
    }
    %c0 = arith.constant 0 : index
    %c0_1 = arith.constant 0 : index
    %3 = vector.load %arg2[%c0, %c0_1] : memref<16x4xf32, #tpu.memory_space<vmem>>, vector<16x4xf32>
    %c0_2 = arith.constant 0 : index
    %c0_3 = arith.constant 0 : index
    %4 = vector.load %arg3[%c0_2, %c0_3] : memref<16x12xf32, #tpu.memory_space<vmem>>, vector<16x12xf32>
    %c0_4 = arith.constant 0 : index
    %c0_5 = arith.constant 0 : index
    %5 = vector.load %arg4[%c0_4, %c0_5] : memref<16x12xf32, #tpu.memory_space<vmem>>, vector<16x12xf32>
    %cst = arith.constant 0.000000e+00 : f32
    %6 = vector.broadcast %cst : f32 to vector<16x128xf32>
    %cst_6 = arith.constant 0.000000e+00 : f32
    %7 = vector.broadcast %cst_6 : f32 to vector<16x128xf32>
    %c0_7 = arith.constant 0 : index
    %c0_8 = arith.constant 0 : index
    %c0_9 = arith.constant 0 : index
    %8 = vector.load %arg6[%c0_7, %c0_8, %c0_9] : memref<12x4x128xf32, #tpu.memory_space<vmem>>, vector<1x4x128xf32>
    %9 = vector.shape_cast %8 : vector<1x4x128xf32> to vector<4x128xf32>
    %cst_10 = arith.constant dense<0.000000e+00> : vector<16x128xf32>
    %10 = tpu.matmul %3, %9, %cst_10 {dimension_numbers = #tpu.dot_dimension_numbers<[1], [0], [0], [1], [0, 0, 1, 1], [], []>} : vector<16x4xf32>, vector<4x128xf32>, vector<16x128xf32> -> vector<16x128xf32>
    %11 = vector.extract_strided_slice %4 {offsets = [0, 0], sizes = [16, 1], strides = [1, 1]} : vector<16x12xf32> to vector<16x1xf32>
    %12 = vector.broadcast %11 : vector<16x1xf32> to vector<16x128xf32>
    %13 = arith.mulf %12, %10 : vector<16x128xf32>
    %14 = arith.addf %6, %13 : vector<16x128xf32>
    %15 = vector.extract_strided_slice %5 {offsets = [0, 0], sizes = [16, 1], strides = [1, 1]} : vector<16x12xf32> to vector<16x1xf32>
    %16 = vector.broadcast %15 : vector<16x1xf32> to vector<16x128xf32>
    %17 = arith.mulf %16, %10 : vector<16x128xf32>
    %18 = arith.addf %7, %17 : vector<16x128xf32>
    %c1 = arith.constant 1 : index
    %c0_11 = arith.constant 0 : index
    %c0_12 = arith.constant 0 : index
    %19 = vector.load %arg6[%c1, %c0_11, %c0_12] : memref<12x4x128xf32, #tpu.memory_space<vmem>>, vector<1x4x128xf32>
    %20 = vector.shape_cast %19 : vector<1x4x128xf32> to vector<4x128xf32>
    %cst_13 = arith.constant dense<0.000000e+00> : vector<16x128xf32>
    %21 = tpu.matmul %3, %20, %cst_13 {dimension_numbers = #tpu.dot_dimension_numbers<[1], [0], [0], [1], [0, 0, 1, 1], [], []>} : vector<16x4xf32>, vector<4x128xf32>, vector<16x128xf32> -> vector<16x128xf32>
    %22 = vector.extract_strided_slice %4 {offsets = [0, 1], sizes = [16, 1], strides = [1, 1]} : vector<16x12xf32> to vector<16x1xf32>
    %23 = vector.broadcast %22 : vector<16x1xf32> to vector<16x128xf32>
    %24 = arith.mulf %23, %21 : vector<16x128xf32>
    %25 = arith.addf %14, %24 : vector<16x128xf32>
    %26 = vector.extract_strided_slice %5 {offsets = [0, 1], sizes = [16, 1], strides = [1, 1]} : vector<16x12xf32> to vector<16x1xf32>
    %27 = vector.broadcast %26 : vector<16x1xf32> to vector<16x128xf32>
    %28 = arith.mulf %27, %21 : vector<16x128xf32>
    %29 = arith.addf %18, %28 : vector<16x128xf32>
    %c2 = arith.constant 2 : index
    %c0_14 = arith.constant 0 : index
    %c0_15 = arith.constant 0 : index
    %30 = vector.load %arg6[%c2, %c0_14, %c0_15] : memref<12x4x128xf32, #tpu.memory_space<vmem>>, vector<1x4x128xf32>
    %31 = vector.shape_cast %30 : vector<1x4x128xf32> to vector<4x128xf32>
    %cst_16 = arith.constant dense<0.000000e+00> : vector<16x128xf32>
    %32 = tpu.matmul %3, %31, %cst_16 {dimension_numbers = #tpu.dot_dimension_numbers<[1], [0], [0], [1], [0, 0, 1, 1], [], []>} : vector<16x4xf32>, vector<4x128xf32>, vector<16x128xf32> -> vector<16x128xf32>
    %33 = vector.extract_strided_slice %4 {offsets = [0, 2], sizes = [16, 1], strides = [1, 1]} : vector<16x12xf32> to vector<16x1xf32>
    %34 = vector.broadcast %33 : vector<16x1xf32> to vector<16x128xf32>
    %35 = arith.mulf %34, %32 : vector<16x128xf32>
    %36 = arith.addf %25, %35 : vector<16x128xf32>
    %37 = vector.extract_strided_slice %5 {offsets = [0, 2], sizes = [16, 1], strides = [1, 1]} : vector<16x12xf32> to vector<16x1xf32>
    %38 = vector.broadcast %37 : vector<16x1xf32> to vector<16x128xf32>
    %39 = arith.mulf %38, %32 : vector<16x128xf32>
    %40 = arith.addf %29, %39 : vector<16x128xf32>
    %c3 = arith.constant 3 : index
    %c0_17 = arith.constant 0 : index
    %c0_18 = arith.constant 0 : index
    %41 = vector.load %arg6[%c3, %c0_17, %c0_18] : memref<12x4x128xf32, #tpu.memory_space<vmem>>, vector<1x4x128xf32>
    %42 = vector.shape_cast %41 : vector<1x4x128xf32> to vector<4x128xf32>
    %cst_19 = arith.constant dense<0.000000e+00> : vector<16x128xf32>
    %43 = tpu.matmul %3, %42, %cst_19 {dimension_numbers = #tpu.dot_dimension_numbers<[1], [0], [0], [1], [0, 0, 1, 1], [], []>} : vector<16x4xf32>, vector<4x128xf32>, vector<16x128xf32> -> vector<16x128xf32>
    %44 = vector.extract_strided_slice %4 {offsets = [0, 3], sizes = [16, 1], strides = [1, 1]} : vector<16x12xf32> to vector<16x1xf32>
    %45 = vector.broadcast %44 : vector<16x1xf32> to vector<16x128xf32>
    %46 = arith.mulf %45, %43 : vector<16x128xf32>
    %47 = arith.addf %36, %46 : vector<16x128xf32>
    %48 = vector.extract_strided_slice %5 {offsets = [0, 3], sizes = [16, 1], strides = [1, 1]} : vector<16x12xf32> to vector<16x1xf32>
    %49 = vector.broadcast %48 : vector<16x1xf32> to vector<16x128xf32>
    %50 = arith.mulf %49, %43 : vector<16x128xf32>
    %51 = arith.addf %40, %50 : vector<16x128xf32>
    %c4 = arith.constant 4 : index
    %c0_20 = arith.constant 0 : index
    %c0_21 = arith.constant 0 : index
    %52 = vector.load %arg6[%c4, %c0_20, %c0_21] : memref<12x4x128xf32, #tpu.memory_space<vmem>>, vector<1x4x128xf32>
    %53 = vector.shape_cast %52 : vector<1x4x128xf32> to vector<4x128xf32>
    %cst_22 = arith.constant dense<0.000000e+00> : vector<16x128xf32>
    %54 = tpu.matmul %3, %53, %cst_22 {dimension_numbers = #tpu.dot_dimension_numbers<[1], [0], [0], [1], [0, 0, 1, 1], [], []>} : vector<16x4xf32>, vector<4x128xf32>, vector<16x128xf32> -> vector<16x128xf32>
    %55 = vector.extract_strided_slice %4 {offsets = [0, 4], sizes = [16, 1], strides = [1, 1]} : vector<16x12xf32> to vector<16x1xf32>
    %56 = vector.broadcast %55 : vector<16x1xf32> to vector<16x128xf32>
    %57 = arith.mulf %56, %54 : vector<16x128xf32>
    %58 = arith.addf %47, %57 : vector<16x128xf32>
    %59 = vector.extract_strided_slice %5 {offsets = [0, 4], sizes = [16, 1], strides = [1, 1]} : vector<16x12xf32> to vector<16x1xf32>
    %60 = vector.broadcast %59 : vector<16x1xf32> to vector<16x128xf32>
    %61 = arith.mulf %60, %54 : vector<16x128xf32>
    %62 = arith.addf %51, %61 : vector<16x128xf32>
    %c5 = arith.constant 5 : index
    %c0_23 = arith.constant 0 : index
    %c0_24 = arith.constant 0 : index
    %63 = vector.load %arg6[%c5, %c0_23, %c0_24] : memref<12x4x128xf32, #tpu.memory_space<vmem>>, vector<1x4x128xf32>
    %64 = vector.shape_cast %63 : vector<1x4x128xf32> to vector<4x128xf32>
    %cst_25 = arith.constant dense<0.000000e+00> : vector<16x128xf32>
    %65 = tpu.matmul %3, %64, %cst_25 {dimension_numbers = #tpu.dot_dimension_numbers<[1], [0], [0], [1], [0, 0, 1, 1], [], []>} : vector<16x4xf32>, vector<4x128xf32>, vector<16x128xf32> -> vector<16x128xf32>
    %66 = vector.extract_strided_slice %4 {offsets = [0, 5], sizes = [16, 1], strides = [1, 1]} : vector<16x12xf32> to vector<16x1xf32>
    %67 = vector.broadcast %66 : vector<16x1xf32> to vector<16x128xf32>
    %68 = arith.mulf %67, %65 : vector<16x128xf32>
    %69 = arith.addf %58, %68 : vector<16x128xf32>
    %70 = vector.extract_strided_slice %5 {offsets = [0, 5], sizes = [16, 1], strides = [1, 1]} : vector<16x12xf32> to vector<16x1xf32>
    %71 = vector.broadcast %70 : vector<16x1xf32> to vector<16x128xf32>
    %72 = arith.mulf %71, %65 : vector<16x128xf32>
    %73 = arith.addf %62, %72 : vector<16x128xf32>
    %c6 = arith.constant 6 : index
    %c0_26 = arith.constant 0 : index
    %c0_27 = arith.constant 0 : index
    %74 = vector.load %arg6[%c6, %c0_26, %c0_27] : memref<12x4x128xf32, #tpu.memory_space<vmem>>, vector<1x4x128xf32>
    %75 = vector.shape_cast %74 : vector<1x4x128xf32> to vector<4x128xf32>
    %cst_28 = arith.constant dense<0.000000e+00> : vector<16x128xf32>
    %76 = tpu.matmul %3, %75, %cst_28 {dimension_numbers = #tpu.dot_dimension_numbers<[1], [0], [0], [1], [0, 0, 1, 1], [], []>} : vector<16x4xf32>, vector<4x128xf32>, vector<16x128xf32> -> vector<16x128xf32>
    %77 = vector.extract_strided_slice %4 {offsets = [0, 6], sizes = [16, 1], strides = [1, 1]} : vector<16x12xf32> to vector<16x1xf32>
    %78 = vector.broadcast %77 : vector<16x1xf32> to vector<16x128xf32>
    %79 = arith.mulf %78, %76 : vector<16x128xf32>
    %80 = arith.addf %69, %79 : vector<16x128xf32>
    %81 = vector.extract_strided_slice %5 {offsets = [0, 6], sizes = [16, 1], strides = [1, 1]} : vector<16x12xf32> to vector<16x1xf32>
    %82 = vector.broadcast %81 : vector<16x1xf32> to vector<16x128xf32>
    %83 = arith.mulf %82, %76 : vector<16x128xf32>
    %84 = arith.addf %73, %83 : vector<16x128xf32>
    %c7 = arith.constant 7 : index
    %c0_29 = arith.constant 0 : index
    %c0_30 = arith.constant 0 : index
    %85 = vector.load %arg6[%c7, %c0_29, %c0_30] : memref<12x4x128xf32, #tpu.memory_space<vmem>>, vector<1x4x128xf32>
    %86 = vector.shape_cast %85 : vector<1x4x128xf32> to vector<4x128xf32>
    %cst_31 = arith.constant dense<0.000000e+00> : vector<16x128xf32>
    %87 = tpu.matmul %3, %86, %cst_31 {dimension_numbers = #tpu.dot_dimension_numbers<[1], [0], [0], [1], [0, 0, 1, 1], [], []>} : vector<16x4xf32>, vector<4x128xf32>, vector<16x128xf32> -> vector<16x128xf32>
    %88 = vector.extract_strided_slice %4 {offsets = [0, 7], sizes = [16, 1], strides = [1, 1]} : vector<16x12xf32> to vector<16x1xf32>
    %89 = vector.broadcast %88 : vector<16x1xf32> to vector<16x128xf32>
    %90 = arith.mulf %89, %87 : vector<16x128xf32>
    %91 = arith.addf %80, %90 : vector<16x128xf32>
    %92 = vector.extract_strided_slice %5 {offsets = [0, 7], sizes = [16, 1], strides = [1, 1]} : vector<16x12xf32> to vector<16x1xf32>
    %93 = vector.broadcast %92 : vector<16x1xf32> to vector<16x128xf32>
    %94 = arith.mulf %93, %87 : vector<16x128xf32>
    %95 = arith.addf %84, %94 : vector<16x128xf32>
    %c8 = arith.constant 8 : index
    %c0_32 = arith.constant 0 : index
    %c0_33 = arith.constant 0 : index
    %96 = vector.load %arg6[%c8, %c0_32, %c0_33] : memref<12x4x128xf32, #tpu.memory_space<vmem>>, vector<1x4x128xf32>
    %97 = vector.shape_cast %96 : vector<1x4x128xf32> to vector<4x128xf32>
    %cst_34 = arith.constant dense<0.000000e+00> : vector<16x128xf32>
    %98 = tpu.matmul %3, %97, %cst_34 {dimension_numbers = #tpu.dot_dimension_numbers<[1], [0], [0], [1], [0, 0, 1, 1], [], []>} : vector<16x4xf32>, vector<4x128xf32>, vector<16x128xf32> -> vector<16x128xf32>
    %99 = vector.extract_strided_slice %4 {offsets = [0, 8], sizes = [16, 1], strides = [1, 1]} : vector<16x12xf32> to vector<16x1xf32>
    %100 = vector.broadcast %99 : vector<16x1xf32> to vector<16x128xf32>
    %101 = arith.mulf %100, %98 : vector<16x128xf32>
    %102 = arith.addf %91, %101 : vector<16x128xf32>
    %103 = vector.extract_strided_slice %5 {offsets = [0, 8], sizes = [16, 1], strides = [1, 1]} : vector<16x12xf32> to vector<16x1xf32>
    %104 = vector.broadcast %103 : vector<16x1xf32> to vector<16x128xf32>
    %105 = arith.mulf %104, %98 : vector<16x128xf32>
    %106 = arith.addf %95, %105 : vector<16x128xf32>
    %c9 = arith.constant 9 : index
    %c0_35 = arith.constant 0 : index
    %c0_36 = arith.constant 0 : index
    %107 = vector.load %arg6[%c9, %c0_35, %c0_36] : memref<12x4x128xf32, #tpu.memory_space<vmem>>, vector<1x4x128xf32>
    %108 = vector.shape_cast %107 : vector<1x4x128xf32> to vector<4x128xf32>
    %cst_37 = arith.constant dense<0.000000e+00> : vector<16x128xf32>
    %109 = tpu.matmul %3, %108, %cst_37 {dimension_numbers = #tpu.dot_dimension_numbers<[1], [0], [0], [1], [0, 0, 1, 1], [], []>} : vector<16x4xf32>, vector<4x128xf32>, vector<16x128xf32> -> vector<16x128xf32>
    %110 = vector.extract_strided_slice %4 {offsets = [0, 9], sizes = [16, 1], strides = [1, 1]} : vector<16x12xf32> to vector<16x1xf32>
    %111 = vector.broadcast %110 : vector<16x1xf32> to vector<16x128xf32>
    %112 = arith.mulf %111, %109 : vector<16x128xf32>
    %113 = arith.addf %102, %112 : vector<16x128xf32>
    %114 = vector.extract_strided_slice %5 {offsets = [0, 9], sizes = [16, 1], strides = [1, 1]} : vector<16x12xf32> to vector<16x1xf32>
    %115 = vector.broadcast %114 : vector<16x1xf32> to vector<16x128xf32>
    %116 = arith.mulf %115, %109 : vector<16x128xf32>
    %117 = arith.addf %106, %116 : vector<16x128xf32>
    %c10 = arith.constant 10 : index
    %c0_38 = arith.constant 0 : index
    %c0_39 = arith.constant 0 : index
    %118 = vector.load %arg6[%c10, %c0_38, %c0_39] : memref<12x4x128xf32, #tpu.memory_space<vmem>>, vector<1x4x128xf32>
    %119 = vector.shape_cast %118 : vector<1x4x128xf32> to vector<4x128xf32>
    %cst_40 = arith.constant dense<0.000000e+00> : vector<16x128xf32>
    %120 = tpu.matmul %3, %119, %cst_40 {dimension_numbers = #tpu.dot_dimension_numbers<[1], [0], [0], [1], [0, 0, 1, 1], [], []>} : vector<16x4xf32>, vector<4x128xf32>, vector<16x128xf32> -> vector<16x128xf32>
    %121 = vector.extract_strided_slice %4 {offsets = [0, 10], sizes = [16, 1], strides = [1, 1]} : vector<16x12xf32> to vector<16x1xf32>
    %122 = vector.broadcast %121 : vector<16x1xf32> to vector<16x128xf32>
    %123 = arith.mulf %122, %120 : vector<16x128xf32>
    %124 = arith.addf %113, %123 : vector<16x128xf32>
    %125 = vector.extract_strided_slice %5 {offsets = [0, 10], sizes = [16, 1], strides = [1, 1]} : vector<16x12xf32> to vector<16x1xf32>
    %126 = vector.broadcast %125 : vector<16x1xf32> to vector<16x128xf32>
    %127 = arith.mulf %126, %120 : vector<16x128xf32>
    %128 = arith.addf %117, %127 : vector<16x128xf32>
    %c11 = arith.constant 11 : index
    %c0_41 = arith.constant 0 : index
    %c0_42 = arith.constant 0 : index
    %129 = vector.load %arg6[%c11, %c0_41, %c0_42] : memref<12x4x128xf32, #tpu.memory_space<vmem>>, vector<1x4x128xf32>
    %130 = vector.shape_cast %129 : vector<1x4x128xf32> to vector<4x128xf32>
    %cst_43 = arith.constant dense<0.000000e+00> : vector<16x128xf32>
    %131 = tpu.matmul %3, %130, %cst_43 {dimension_numbers = #tpu.dot_dimension_numbers<[1], [0], [0], [1], [0, 0, 1, 1], [], []>} : vector<16x4xf32>, vector<4x128xf32>, vector<16x128xf32> -> vector<16x128xf32>
    %132 = vector.extract_strided_slice %4 {offsets = [0, 11], sizes = [16, 1], strides = [1, 1]} : vector<16x12xf32> to vector<16x1xf32>
    %133 = vector.broadcast %132 : vector<16x1xf32> to vector<16x128xf32>
    %134 = arith.mulf %133, %131 : vector<16x128xf32>
    %135 = arith.addf %124, %134 : vector<16x128xf32>
    %136 = vector.extract_strided_slice %5 {offsets = [0, 11], sizes = [16, 1], strides = [1, 1]} : vector<16x12xf32> to vector<16x1xf32>
    %137 = vector.broadcast %136 : vector<16x1xf32> to vector<16x128xf32>
    %138 = arith.mulf %137, %131 : vector<16x128xf32>
    %139 = arith.addf %128, %138 : vector<16x128xf32>
    %140 = tpu.concatenate %135, %139 in 1 : vector<16x128xf32>, vector<16x128xf32> -> vector<16x256xf32>
    %c0_44 = arith.constant 0 : index
    %c0_45 = arith.constant 0 : index
    %c0_46 = arith.constant 0 : index
    %141 = vector.load %arg5[%c0_44, %c0_45, %c0_46] : memref<1x1x16xi32, #tpu.memory_space<vmem>>, vector<1x1x16xi32>
    %142 = vector.shape_cast %141 : vector<1x1x16xi32> to vector<1x16xi32>
    %143 = tpu.iota {dimensions = array<i32: 0>} : vector<8x16xi32>
    %144 = vector.broadcast %142 : vector<1x16xi32> to vector<8x16xi32>
    %145 = arith.cmpi eq, %143, %144 : vector<8x16xi32>
    %146 = arith.extui %145 : vector<8x16xi1> to vector<8x16xi32>
    %147 = arith.sitofp %146 : vector<8x16xi32> to vector<8x16xf32>
    %c0_47 = arith.constant 0 : index
    %c0_48 = arith.constant 0 : index
    %148 = vector.load %arg10[%c0_47, %c0_48] : memref<8x256xf32, #tpu.memory_space<vmem>>, vector<8x256xf32>
    %cst_49 = arith.constant dense<0.000000e+00> : vector<8x256xf32>
    %149 = tpu.matmul %147, %140, %cst_49 {dimension_numbers = #tpu.dot_dimension_numbers<[1], [0], [0], [1], [0, 0, 1, 1], [], []>} : vector<8x16xf32>, vector<16x256xf32>, vector<8x256xf32> -> vector<8x256xf32>
    %150 = arith.addf %148, %149 : vector<8x256xf32>
    %c0_50 = arith.constant 0 : index
    %c0_51 = arith.constant 0 : index
    %151 = vector.load %arg10[%c0_50, %c0_51] : memref<8x256xf32, #tpu.memory_space<vmem>>, vector<8x256xf32>
    tpu.vector_store %arg10[%c0_50, %c0_51], %150 {strides = array<i32>} : memref<8x256xf32, #tpu.memory_space<vmem>>, vector<8x256xf32>,
    %c3_i32 = arith.constant 3 : i32
    %152 = arith.cmpi eq, %arg1, %c3_i32 : i32
    %153 = arith.extui %152 : i1 to i32
    %c0_i32_52 = arith.constant 0 : i32
    %154 = arith.cmpi ne, %153, %c0_i32_52 : i32
    scf.if %154 {
      %c0_53 = arith.constant 0 : index
      %c0_54 = arith.constant 0 : index
      %155 = vector.load %arg10[%c0_53, %c0_54] : memref<8x256xf32, #tpu.memory_space<vmem>>, vector<8x256xf32>
      %156 = vector.extract_strided_slice %155 {offsets = [0, 0], sizes = [8, 128], strides = [1, 1]} : vector<8x256xf32> to vector<8x128xf32>
      %157 = vector.extract_strided_slice %155 {offsets = [0, 128], sizes = [8, 128], strides = [1, 1]} : vector<8x256xf32> to vector<8x128xf32>
      %c0_55 = arith.constant 0 : index
      %c0_56 = arith.constant 0 : index
      %158 = vector.load %arg7[%c0_55, %c0_56] : memref<1x128xf32, #tpu.memory_space<vmem>>, vector<1x128xf32>
      %c0_57 = arith.constant 0 : index
      %c0_58 = arith.constant 0 : index
      %159 = vector.load %arg8[%c0_57, %c0_58] : memref<1x128xf32, #tpu.memory_space<vmem>>, vector<1x128xf32>
      %160 = vector.broadcast %158 : vector<1x128xf32> to vector<8x128xf32>
      %161 = arith.mulf %156, %160 : vector<8x128xf32>
      %162 = vector.broadcast %159 : vector<1x128xf32> to vector<8x128xf32>
      %163 = arith.mulf %157, %162 : vector<8x128xf32>
      %164 = arith.subf %161, %163 : vector<8x128xf32>
      %165 = vector.broadcast %159 : vector<1x128xf32> to vector<8x128xf32>
      %166 = arith.mulf %156, %165 : vector<8x128xf32>
      %167 = vector.broadcast %158 : vector<1x128xf32> to vector<8x128xf32>
      %168 = arith.mulf %157, %167 : vector<8x128xf32>
      %169 = arith.addf %166, %168 : vector<8x128xf32>
      %170 = arith.mulf %164, %164 : vector<8x128xf32>
      %171 = arith.mulf %169, %169 : vector<8x128xf32>
      %172 = arith.addf %170, %171 : vector<8x128xf32>
      %173 = math.sqrt %172 : vector<8x128xf32>
      %cst_59 = arith.constant 9.99999997E-7 : f32
      %174 = vector.broadcast %cst_59 : f32 to vector<8x128xf32>
      %175 = arith.addf %173, %174 : vector<8x128xf32>
      %176 = tpu.reciprocal %175 : vector<8x128xf32> -> vector<8x128xf32>
      %c0_60 = arith.constant 0 : index
      %c0_61 = arith.constant 0 : index
      %177 = vector.load %arg9[%c0_60, %c0_61] : memref<1x128xf32, #tpu.memory_space<vmem>>, vector<1x128xf32>
      %178 = vector.broadcast %177 : vector<1x128xf32> to vector<8x128xf32>
      %179 = arith.addf %173, %178 : vector<8x128xf32>
      %cst_62 = arith.constant 0.000000e+00 : f32
      %180 = vector.broadcast %cst_62 : f32 to vector<8x128xf32>
      %181 = arith.maximumf %179, %180 : vector<8x128xf32>
      %182 = arith.mulf %181, %176 : vector<8x128xf32>
      %183 = arith.mulf %164, %182 : vector<8x128xf32>
      %184 = arith.mulf %169, %182 : vector<8x128xf32>
      %185 = tpu.concatenate %183, %184 in 1 : vector<8x128xf32>, vector<8x128xf32> -> vector<8x256xf32>
      %c0_63 = arith.constant 0 : index
      %c0_64 = arith.constant 0 : index
      %186 = vector.load %arg10[%c0_63, %c0_64] : memref<8x256xf32, #tpu.memory_space<vmem>>, vector<8x256xf32>
      tpu.vector_store %arg10[%c0_63, %c0_64], %185 {strides = array<i32>} : memref<8x256xf32, #tpu.memory_space<vmem>>, vector<8x256xf32>,
    } else {
    }
    return
  }
  func.func @transform_0(%arg0: i32, %arg1: i32) -> (i32, i32) {
    %c4_i32 = arith.constant 4 : i32
    %0 = arith.muli %arg0, %c4_i32 : i32
    %1 = arith.addi %0, %arg1 : i32
    %c0_i32 = arith.constant 0 : i32
    %c0_i32_0 = arith.constant 0 : i32
    return %1, %c0_i32 : i32, i32
  }
  func.func @transform_1(%arg0: i32, %arg1: i32) -> (i32, i32) {
    %c4_i32 = arith.constant 4 : i32
    %0 = arith.muli %arg0, %c4_i32 : i32
    %1 = arith.addi %0, %arg1 : i32
    %c0_i32 = arith.constant 0 : i32
    %c0_i32_0 = arith.constant 0 : i32
    return %1, %c0_i32 : i32, i32
  }
  func.func @transform_2(%arg0: i32, %arg1: i32) -> (i32, i32) {
    %c4_i32 = arith.constant 4 : i32
    %0 = arith.muli %arg0, %c4_i32 : i32
    %1 = arith.addi %0, %arg1 : i32
    %c0_i32 = arith.constant 0 : i32
    %c0_i32_0 = arith.constant 0 : i32
    return %1, %c0_i32 : i32, i32
  }
  func.func @transform_3(%arg0: i32, %arg1: i32) -> (i32, i32, i32) {
    %c4_i32 = arith.constant 4 : i32
    %0 = arith.muli %arg0, %c4_i32 : i32
    %1 = arith.addi %0, %arg1 : i32
    %c0_i32 = arith.constant 0 : i32
    %c0_i32_0 = arith.constant 0 : i32
    %c0_i32_1 = arith.constant 0 : i32
    return %1, %c0_i32, %c0_i32_0 : i32, i32, i32
  }
  func.func @transform_4(%arg0: i32, %arg1: i32) -> (i32, i32, i32) {
    %c0_i32 = arith.constant 0 : i32
    %c0_i32_0 = arith.constant 0 : i32
    %c0_i32_1 = arith.constant 0 : i32
    %c0_i32_2 = arith.constant 0 : i32
    return %c0_i32, %c0_i32_0, %c0_i32_1 : i32, i32, i32
  }
  func.func @transform_5(%arg0: i32, %arg1: i32) -> (i32, i32) {
    %c0_i32 = arith.constant 0 : i32
    %c0_i32_0 = arith.constant 0 : i32
    %c0_i32_1 = arith.constant 0 : i32
    return %c0_i32, %c0_i32_0 : i32, i32
  }
  func.func @transform_6(%arg0: i32, %arg1: i32) -> (i32, i32) {
    %c0_i32 = arith.constant 0 : i32
    %c0_i32_0 = arith.constant 0 : i32
    %c0_i32_1 = arith.constant 0 : i32
    return %c0_i32, %c0_i32_0 : i32, i32
  }
  func.func @transform_7(%arg0: i32, %arg1: i32) -> (i32, i32) {
    %c0_i32 = arith.constant 0 : i32
    %c0_i32_0 = arith.constant 0 : i32
    %c0_i32_1 = arith.constant 0 : i32
    return %c0_i32, %c0_i32_0 : i32, i32
  }
  func.func @transform_8(%arg0: i32, %arg1: i32) -> (i32, i32) {
    %c0_i32 = arith.constant 0 : i32
    %c0_i32_0 = arith.constant 0 : i32
    return %arg0, %c0_i32 : i32, i32
  }
}

</mosaic_0001>

<llo_original>
// kernel: tpu_custom_call.1
$region0: #{tpu_custom_call.1}
  #allocation0 [shape = 'u32[]', space=smem, size = 0x4, offset = 0x4, fixed_abs, tag = 'smem constant byte address 0x4 - core index']
  #allocation1 [shape = 'u32[144,128]{1,0:T(1,128)}', space=vmem, size = 0x12000, scoped, tag = 'internal scratch']
  %s0 = inlined_call_operand.vmem [shape: f32[128,4], index: 0, kind: input, shape index: {}]
  %s1 = inlined_call_operand.vmem [shape: f32[128,12], index: 1, kind: input, shape index: {}]
  %s2 = inlined_call_operand.vmem [shape: f32[128,12], index: 2, kind: input, shape index: {}]
  %s3 = inlined_call_operand.vmem [shape: s32[8,1,16], index: 3, kind: input, shape index: {}]
  %s4 = inlined_call_operand.vmem [shape: f32[12,4,128], index: 4, kind: input, shape index: {}]
  %s5 = inlined_call_operand.vmem [shape: f32[1,128], index: 5, kind: input, shape index: {}]
  %s6 = inlined_call_operand.vmem [shape: f32[1,128], index: 6, kind: input, shape index: {}]
  %s7 = inlined_call_operand.vmem [shape: f32[1,128], index: 7, kind: input, shape index: {}]
  %s8 = inlined_call_operand.hbm [shape: f32[16,256], index: 8, kind: output, shape index: {}]
  %s9 = sld [smem:[#allocation0]]
  $region73: #{tpu_custom_call.1} parent=0
    _
  %s11 = ssub.s32 1, %s9
  %s12 = scalar_select 0, %s11, %s9
  $region1: #{tpu_custom_call.1} parent=0
    #allocation2 [shape = 'u8[16384]{0}', space=vmem, size = 0x4000, scoped, tag = 'output window, operand 0']
    #allocation3 [shape = 's32[2]{0}', space=sflag, size = 0x8, scoped, tag = 'scoped memory for tpu_custom_call.1']
    %13 = vsyncpa [#allocation3], 0
    %s14 = scalar_lea.sflag [#allocation3], 1
    %15 = vsyncpa %s14, 0
    loop: start=0, step=1, limit=10
    $region2: #{tpu_custom_call.1} parent=1 // loop_pre_header
      _
    $region3: #{tpu_custom_call.1} parent=1 // loop_header
      %s17 = sphi 0, %s21
      %p18 = scmp.ge.s32.totalorder %s17, 10
      %s24 = sphi 0, %s36
      %s25 = sphi 0, %s32
      %s26 = sphi 0, %s24
      %s27 = sphi 0, %s25
      %s28 = sphi 0, %s26
      %s29 = sphi 0, %s27
      %s43 = sphi 0, %s45
      %s46 = sphi 0, %s43
      %s47 = sphi 0, %s46
      %s63 = sphi 0, %s47
      %s73 = sphi 0, %s75
      %s76 = sphi 0, %s73
      %s77 = sphi 0, %s76
      %s93 = sphi 0, %s77
      %s103 = sphi 0, %s105
      %s106 = sphi 0, %s103
      %s107 = sphi 0, %s106
      %s123 = sphi 0, %s107
      %s133 = sphi 0, %s135
      %s136 = sphi 0, %s133
      %s137 = sphi 0, %s136
      %s153 = sphi 0, %s137
      %s157 = sphi 0, %s157
      %s159 = sphi 0, %s157
      %s160 = sphi 0, %s159
      %s174 = sphi 0, %s160
      %s178 = sphi 0, %s178
      %s180 = sphi 0, %s178
      %s181 = sphi 0, %s180
      %s195 = sphi 0, %s181
      %s199 = sphi 0, %s199
      %s201 = sphi 0, %s199
      %s202 = sphi 0, %s201
      %s216 = sphi 0, %s202
      %s220 = sphi 0, %s220
      %s222 = sphi 0, %s220
      %s223 = sphi 0, %s222
      %s237 = sphi 0, %s223
      %s243 = sphi 0, %s245
      %s246 = sphi 0, %s243
      %s247 = sphi 0, %s246
      %s263 = sphi 0, %s247
    $region4: #{tpu_custom_call.1} parent=1 // loop_header_branch
      %20 = sbr.rel (%p18) target = $region8
    $region5: #{tpu_custom_call.1} parent=1 // loop_body
      %s22 = ssub.s32 %s17, 1
      %s23 = ssub.s32 %s17, 2
      %s30 = sadd.s32 1, %s25
      %p31 = scmp.ge.s32.totalorder %s30, 4
      %s32 = scalar_select %p31, 0, %s30
      %s33 = sadd.s32 1, %s24
      %s34 = scalar_select %p31, %s33, %s24
      %p35 = scmp.ge.s32.totalorder %s34, 2
      %s36 = scalar_select %p35, 0, %s34
      %s37 = smul.u32 %s24, 4
      %s38 = sadd.s32 %s37, %s25
      %s39 = smul.u32 %s36, 4
      %s40 = sadd.s32 %s39, %s32
      %s41 = ssub.s32 %s38, %s40
      %p42 = scmp.eq.s32.totalorder %s41, 0
      %s44 = sadd.s32 %s43, 1
      %s45 = scalar_select %p42, %s43, %s44
      %p48 = pneg %p42
      %p49 = scmp.eq.s32.totalorder %s17, 7
      %p50 = por %p48, %p49
      %p51 = scmp.ne.s32.totalorder %s43, %s46
      %p52 = scmp.eq.s32.totalorder %s17, 0
      %p53 = por %p51, %p52
      %p54 = scmp.ne.s32.totalorder %s43, %s46
      %p55 = scmp.eq.s32.totalorder %s22, 7
      %p56 = por %p54, %p55
      %p57 = scmp.ne.s32.totalorder %s46, %s47
      %p58 = scmp.eq.s32.totalorder %s22, 0
      %p59 = por %p57, %p58
      %p60 = scmp.ne.s32.totalorder %s46, %s47
      %p61 = scmp.eq.s32.totalorder %s23, 7
      %p62 = por %p60, %p61
      %p64 = scmp.ne.s32.totalorder %s47, %s63
      %p65 = scmp.eq.s32.totalorder %s23, 0
      %p66 = por %p64, %p65
      %s67 = smul.u32 %s24, 4
      %s68 = sadd.s32 %s67, %s25
      %s69 = smul.u32 %s36, 4
      %s70 = sadd.s32 %s69, %s32
      %s71 = ssub.s32 %s68, %s70
      %p72 = scmp.eq.s32.totalorder %s71, 0
      %s74 = sadd.s32 %s73, 1
      %s75 = scalar_select %p72, %s73, %s74
      %p78 = pneg %p72
      %p79 = scmp.eq.s32.totalorder %s17, 7
      %p80 = por %p78, %p79
      %p81 = scmp.ne.s32.totalorder %s73, %s76
      %p82 = scmp.eq.s32.totalorder %s17, 0
      %p83 = por %p81, %p82
      %p84 = scmp.ne.s32.totalorder %s73, %s76
      %p85 = scmp.eq.s32.totalorder %s22, 7
      %p86 = por %p84, %p85
      %p87 = scmp.ne.s32.totalorder %s76, %s77
      %p88 = scmp.eq.s32.totalorder %s22, 0
      %p89 = por %p87, %p88
      %p90 = scmp.ne.s32.totalorder %s76, %s77
      %p91 = scmp.eq.s32.totalorder %s23, 7
      %p92 = por %p90, %p91
      %p94 = scmp.ne.s32.totalorder %s77, %s93
      %p95 = scmp.eq.s32.totalorder %s23, 0
      %p96 = por %p94, %p95
      %s97 = smul.u32 %s24, 4
      %s98 = sadd.s32 %s97, %s25
      %s99 = smul.u32 %s36, 4
      %s100 = sadd.s32 %s99, %s32
      %s101 = ssub.s32 %s98, %s100
      %p102 = scmp.eq.s32.totalorder %s101, 0
      %s104 = sadd.s32 %s103, 1
      %s105 = scalar_select %p102, %s103, %s104
      %p108 = pneg %p102
      %p109 = scmp.eq.s32.totalorder %s17, 7
      %p110 = por %p108, %p109
      %p111 = scmp.ne.s32.totalorder %s103, %s106
      %p112 = scmp.eq.s32.totalorder %s17, 0
      %p113 = por %p111, %p112
      %p114 = scmp.ne.s32.totalorder %s103, %s106
      %p115 = scmp.eq.s32.totalorder %s22, 7
      %p116 = por %p114, %p115
      %p117 = scmp.ne.s32.totalorder %s106, %s107
      %p118 = scmp.eq.s32.totalorder %s22, 0
      %p119 = por %p117, %p118
      %p120 = scmp.ne.s32.totalorder %s106, %s107
      %p121 = scmp.eq.s32.totalorder %s23, 7
      %p122 = por %p120, %p121
      %p124 = scmp.ne.s32.totalorder %s107, %s123
      %p125 = scmp.eq.s32.totalorder %s23, 0
      %p126 = por %p124, %p125
      %s127 = smul.u32 %s24, 4
      %s128 = sadd.s32 %s127, %s25
      %s129 = smul.u32 %s36, 4
      %s130 = sadd.s32 %s129, %s32
      %s131 = ssub.s32 %s128, %s130
      %p132 = scmp.eq.s32.totalorder %s131, 0
      %s134 = sadd.s32 %s133, 1
      %s135 = scalar_select %p132, %s133, %s134
      %p138 = pneg %p132
      %p139 = scmp.eq.s32.totalorder %s17, 7
      %p140 = por %p138, %p139
      %p141 = scmp.ne.s32.totalorder %s133, %s136
      %p142 = scmp.eq.s32.totalorder %s17, 0
      %p143 = por %p141, %p142
      %p144 = scmp.ne.s32.totalorder %s133, %s136
      %p145 = scmp.eq.s32.totalorder %s22, 7
      %p146 = por %p144, %p145
      %p147 = scmp.ne.s32.totalorder %s136, %s137
      %p148 = scmp.eq.s32.totalorder %s22, 0
      %p149 = por %p147, %p148
      %p150 = scmp.ne.s32.totalorder %s136, %s137
      %p151 = scmp.eq.s32.totalorder %s23, 7
      %p152 = por %p150, %p151
      %p154 = scmp.ne.s32.totalorder %s137, %s153
      %p155 = scmp.eq.s32.totalorder %s23, 0
      %p156 = por %p154, %p155
      %s158 = sadd.s32 %s157, 1
      %p161 = scmp.eq.s32.totalorder %s17, 7
      %p162 = scmp.ne.s32.totalorder %s157, %s159
      %p163 = scmp.eq.s32.totalorder %s17, 0
      %p164 = por %p162, %p163
      %p165 = scmp.ne.s32.totalorder %s157, %s159
      %p166 = scmp.eq.s32.totalorder %s22, 7
      %p167 = por %p165, %p166
      %p168 = scmp.ne.s32.totalorder %s159, %s160
      %p169 = scmp.eq.s32.totalorder %s22, 0
      %p170 = por %p168, %p169
      %p171 = scmp.ne.s32.totalorder %s159, %s160
      %p172 = scmp.eq.s32.totalorder %s23, 7
      %p173 = por %p171, %p172
      %p175 = scmp.ne.s32.totalorder %s160, %s174
      %p176 = scmp.eq.s32.totalorder %s23, 0
      %p177 = por %p175, %p176
      %s179 = sadd.s32 %s178, 1
      %p182 = scmp.eq.s32.totalorder %s17, 7
      %p183 = scmp.ne.s32.totalorder %s178, %s180
      %p184 = scmp.eq.s32.totalorder %s17, 0
      %p185 = por %p183, %p184
      %p186 = scmp.ne.s32.totalorder %s178, %s180
      %p187 = scmp.eq.s32.totalorder %s22, 7
      %p188 = por %p186, %p187
      %p189 = scmp.ne.s32.totalorder %s180, %s181
      %p190 = scmp.eq.s32.totalorder %s22, 0
      %p191 = por %p189, %p190
      %p192 = scmp.ne.s32.totalorder %s180, %s181
      %p193 = scmp.eq.s32.totalorder %s23, 7
      %p194 = por %p192, %p193
      %p196 = scmp.ne.s32.totalorder %s181, %s195
      %p197 = scmp.eq.s32.totalorder %s23, 0
      %p198 = por %p196, %p197
      %s200 = sadd.s32 %s199, 1
      %p203 = scmp.eq.s32.totalorder %s17, 7
      %p204 = scmp.ne.s32.totalorder %s199, %s201
      %p205 = scmp.eq.s32.totalorder %s17, 0
      %p206 = por %p204, %p205
      %p207 = scmp.ne.s32.totalorder %s199, %s201
      %p208 = scmp.eq.s32.totalorder %s22, 7
      %p209 = por %p207, %p208
      %p210 = scmp.ne.s32.totalorder %s201, %s202
      %p211 = scmp.eq.s32.totalorder %s22, 0
      %p212 = por %p210, %p211
      %p213 = scmp.ne.s32.totalorder %s201, %s202
      %p214 = scmp.eq.s32.totalorder %s23, 7
      %p215 = por %p213, %p214
      %p217 = scmp.ne.s32.totalorder %s202, %s216
      %p218 = scmp.eq.s32.totalorder %s23, 0
      %p219 = por %p217, %p218
      %s221 = sadd.s32 %s220, 1
      %p224 = scmp.eq.s32.totalorder %s17, 7
      %p225 = scmp.ne.s32.totalorder %s220, %s222
      %p226 = scmp.eq.s32.totalorder %s17, 0
      %p227 = por %p225, %p226
      %p228 = scmp.ne.s32.totalorder %s220, %s222
      %p229 = scmp.eq.s32.totalorder %s22, 7
      %p230 = por %p228, %p229
      %p231 = scmp.ne.s32.totalorder %s222, %s223
      %p232 = scmp.eq.s32.totalorder %s22, 0
      %p233 = por %p231, %p232
      %p234 = scmp.ne.s32.totalorder %s222, %s223
      %p235 = scmp.eq.s32.totalorder %s23, 7
      %p236 = por %p234, %p235
      %p238 = scmp.ne.s32.totalorder %s223, %s237
      %p239 = scmp.eq.s32.totalorder %s23, 0
      %p240 = por %p238, %p239
      %s241 = ssub.s32 %s24, %s36
      %p242 = scmp.eq.s32.totalorder %s241, 0
      %s244 = sadd.s32 %s243, 1
      %s245 = scalar_select %p242, %s243, %s244
      %p248 = pneg %p242
      %p249 = scmp.eq.s32.totalorder %s17, 7
      %p250 = por %p248, %p249
      %p251 = scmp.ne.s32.totalorder %s243, %s246
      %p252 = scmp.eq.s32.totalorder %s17, 0
      %p253 = por %p251, %p252
      %p254 = scmp.ne.s32.totalorder %s243, %s246
      %p255 = scmp.eq.s32.totalorder %s22, 7
      %p256 = por %p254, %p255
      %p257 = scmp.ne.s32.totalorder %s246, %s247
      %p258 = scmp.eq.s32.totalorder %s22, 0
      %p259 = por %p257, %p258
      %p260 = scmp.ne.s32.totalorder %s246, %s247
      %p261 = scmp.eq.s32.totalorder %s23, 7
      %p262 = por %p260, %p261
      %p264 = scmp.ne.s32.totalorder %s247, %s263
      %p265 = scmp.eq.s32.totalorder %s23, 0
      %p266 = por %p264, %p265
      %p267 = scmp.le.s32.totalorder 1, %s17
      %p268 = scmp.lt.s32.totalorder %s17, 9
      %p269 = pnand %p267, %p268
      %p270 = pneg %p269
      // Predicated region
      $region9: #{tpu_custom_call.1} parent=5 // pred_check
        _
      $region10: #{tpu_custom_call.1} parent=5 // pred_check_branch
        %272 = sbr.rel (%p269) target = $region12
      $region11: #{tpu_custom_call.1} parent=5 // pred_region
        %s273 = ssub.s32 %s17, 1
        // Predicated region
        $region13: #{tpu_custom_call.1} parent=11 // pred_check
          %p274 = pneg %p170
        $region14: #{tpu_custom_call.1} parent=11 // pred_check_branch
          %276 = sbr.rel (%p274) target = $region16
        $region15: #{tpu_custom_call.1} parent=11 // pred_region
          _
        $region16: #{tpu_custom_call.1} parent=11 // pred_fallthru
          _
        // Predicated region
        $region17: #{tpu_custom_call.1} parent=11 // pred_check
          %p277 = pneg %p191
        $region18: #{tpu_custom_call.1} parent=11 // pred_check_branch
          %279 = sbr.rel (%p277) target = $region20
        $region19: #{tpu_custom_call.1} parent=11 // pred_region
          _
        $region20: #{tpu_custom_call.1} parent=11 // pred_fallthru
          _
        // Predicated region
        $region21: #{tpu_custom_call.1} parent=11 // pred_check
          %p280 = pneg %p212
        $region22: #{tpu_custom_call.1} parent=11 // pred_check_branch
          %282 = sbr.rel (%p280) target = $region24
        $region23: #{tpu_custom_call.1} parent=11 // pred_region
          _
        $region24: #{tpu_custom_call.1} parent=11 // pred_fallthru
          _
        // Predicated region
        $region25: #{tpu_custom_call.1} parent=11 // pred_check
          %p283 = pneg %p233
        $region26: #{tpu_custom_call.1} parent=11 // pred_check_branch
          %285 = sbr.rel (%p283) target = $region28
        $region27: #{tpu_custom_call.1} parent=11 // pred_region
          _
        $region28: #{tpu_custom_call.1} parent=11 // pred_fallthru
          _
      $region12: #{tpu_custom_call.1} parent=5 // pred_fallthru
        _
      %p286 = scmp.lt.s32.totalorder %s17, 8
      // Predicated region
      $region29: #{tpu_custom_call.1} parent=5 // pred_check
        %p287 = pneg %p286
      $region30: #{tpu_custom_call.1} parent=5 // pred_check_branch
        %289 = sbr.rel (%p287) target = $region32
      $region31: #{tpu_custom_call.1} parent=5 // pred_region
        // Predicated region
        $region33: #{tpu_custom_call.1} parent=31 // pred_check
          %p290 = pneg %p53
        $region34: #{tpu_custom_call.1} parent=31 // pred_check_branch
          %292 = sbr.rel (%p290) target = $region36
        $region35: #{tpu_custom_call.1} parent=31 // pred_region
          %s293 = smul.u32 %s24, 4
          %s294 = sadd.s32 %s293, %s25
          %s295 = smul.u32 2, %s294
          %p296 = scmp.lt.s32.totalorder %s295, 15
          %s297 = scalar_select %p296, %s295, 15
          %s298 = smul.addr %s297, 8
          %s299 = scalar_lea.vmem %s0, %s298
          %s300 = smul.u32 %s24, 4
          %s301 = sadd.s32 %s300, %s25
          %s302 = smul.u32 2, %s301
        $region36: #{tpu_custom_call.1} parent=31 // pred_fallthru
          _
        // Predicated region
        $region37: #{tpu_custom_call.1} parent=31 // pred_check
          %p303 = pneg %p83
        $region38: #{tpu_custom_call.1} parent=31 // pred_check_branch
          %305 = sbr.rel (%p303) target = $region40
        $region39: #{tpu_custom_call.1} parent=31 // pred_region
          %s306 = smul.u32 %s24, 4
          %s307 = sadd.s32 %s306, %s25
          %s308 = smul.u32 2, %s307
          %p309 = scmp.lt.s32.totalorder %s308, 15
          %s310 = scalar_select %p309, %s308, 15
          %s311 = smul.addr %s310, 8
          %s312 = scalar_lea.vmem %s1, %s311
          %s313 = smul.u32 %s24, 4
          %s314 = sadd.s32 %s313, %s25
          %s315 = smul.u32 2, %s314
        $region40: #{tpu_custom_call.1} parent=31 // pred_fallthru
          _
        // Predicated region
        $region41: #{tpu_custom_call.1} parent=31 // pred_check
          %p316 = pneg %p113
        $region42: #{tpu_custom_call.1} parent=31 // pred_check_branch
          %318 = sbr.rel (%p316) target = $region44
        $region43: #{tpu_custom_call.1} parent=31 // pred_region
          %s319 = smul.u32 %s24, 4
          %s320 = sadd.s32 %s319, %s25
          %s321 = smul.u32 2, %s320
          %p322 = scmp.lt.s32.totalorder %s321, 15
          %s323 = scalar_select %p322, %s321, 15
          %s324 = smul.addr %s323, 8
          %s325 = scalar_lea.vmem %s2, %s324
          %s326 = smul.u32 %s24, 4
          %s327 = sadd.s32 %s326, %s25
          %s328 = smul.u32 2, %s327
        $region44: #{tpu_custom_call.1} parent=31 // pred_fallthru
          _
        // Predicated region
        $region45: #{tpu_custom_call.1} parent=31 // pred_check
          %p329 = pneg %p143
        $region46: #{tpu_custom_call.1} parent=31 // pred_check_branch
          %331 = sbr.rel (%p329) target = $region48
        $region47: #{tpu_custom_call.1} parent=31 // pred_region
          %s332 = smul.u32 %s24, 4
          %s333 = sadd.s32 %s332, %s25
          %p334 = scmp.lt.s32.totalorder %s333, 7
          %s335 = scalar_select %p334, %s333, 7
          %s336 = scalar_lea.vmem %s3, %s335
          %s337 = smul.u32 %s24, 4
          %s338 = sadd.s32 %s337, %s25
        $region48: #{tpu_custom_call.1} parent=31 // pred_fallthru
          _
      $region32: #{tpu_custom_call.1} parent=5 // pred_fallthru
        _
      %p339 = scmp.le.s32.totalorder 1, %s17
      %p340 = scmp.lt.s32.totalorder %s17, 9
      %p341 = pnand %p339, %p340
      %p342 = pneg %p341
      // Predicated region
      $region49: #{tpu_custom_call.1} parent=5 // pred_check
        _
      $region50: #{tpu_custom_call.1} parent=5 // pred_check_branch
        %344 = sbr.rel (%p341) target = $region52
      $region51: #{tpu_custom_call.1} parent=5 // pred_region
        %s345 = ssub.s32 %s17, 1
        %s346 = smul.u32 %s26, 4
        %s347 = sadd.s32 %s346, %s27
        %s348 = smul.u32 2, %s347
        %p349 = scmp.lt.s32.totalorder %s348, 15
        %s350 = scalar_select %p349, %s348, 15
        %s351 = smul.addr %s350, 8
        %s352 = scalar_lea.vmem %s0, %s351
        %p353 = pneg %p59
        %p354 = pneg %p56
        %s355 = smul.u32 %s26, 4
        %s356 = sadd.s32 %s355, %s27
        %s357 = smul.u32 2, %s356
        %p358 = scmp.lt.s32.totalorder %s357, 15
        %s359 = scalar_select %p358, %s357, 15
        %s360 = smul.addr %s359, 8
        %s361 = scalar_lea.vmem %s1, %s360
        %p362 = pneg %p89
        %p363 = pneg %p86
        %s364 = smul.u32 %s26, 4
        %s365 = sadd.s32 %s364, %s27
        %s366 = smul.u32 2, %s365
        %p367 = scmp.lt.s32.totalorder %s366, 15
        %s368 = scalar_select %p367, %s366, 15
        %s369 = smul.addr %s368, 8
        %s370 = scalar_lea.vmem %s2, %s369
        %p371 = pneg %p119
        %p372 = pneg %p116
        %s373 = smul.u32 %s26, 4
        %s374 = sadd.s32 %s373, %s27
        %p375 = scmp.lt.s32.totalorder %s374, 7
        %s376 = scalar_select %p375, %s374, 7
        %s377 = scalar_lea.vmem %s3, %s376
        %p378 = pneg %p149
        %p379 = pneg %p146
        %p380 = pneg %p170
        %p381 = pneg %p167
        %p382 = pneg %p191
        %p383 = pneg %p188
        %p384 = pneg %p212
        %p385 = pneg %p209
        %p386 = pneg %p233
        %p387 = pneg %p230
        %p388 = pneg %p259
        %p389 = pneg %p256
        %s390 = sand.u32 %s246, 1
        %s391 = scalar_lea.sflag [#allocation3], %s390
        %s392 = sand.u32 %s246, 1
        %s393 = smul.addr %s392, 16
        %s394 = scalar_lea.vmem [#allocation2], %s393
        %s395 = smul.u32 %s26, 4
        %s396 = sadd.s32 %s395, %s27
        %s397 = smul.u32 2, %s396
        %p398 = scmp.lt.s32.totalorder %s397, 15
        %s399 = scalar_select %p398, %s397, 15
        %s400 = smul.addr %s399, 8
        %s401 = scalar_lea.vmem %s0, %s400
        %s402 = smul.u32 %s26, 4
        %s403 = sadd.s32 %s402, %s27
        %s404 = smul.u32 2, %s403
        %s405 = smul.u32 %s26, 4
        %s406 = sadd.s32 %s405, %s27
        %s407 = smul.u32 2, %s406
        %p408 = scmp.lt.s32.totalorder %s407, 15
        %s409 = scalar_select %p408, %s407, 15
        %s410 = smul.addr %s409, 8
        %s411 = scalar_lea.vmem %s1, %s410
        %s412 = smul.u32 %s26, 4
        %s413 = sadd.s32 %s412, %s27
        %s414 = smul.u32 2, %s413
        %s415 = smul.u32 %s26, 4
        %s416 = sadd.s32 %s415, %s27
        %s417 = smul.u32 2, %s416
        %p418 = scmp.lt.s32.totalorder %s417, 15
        %s419 = scalar_select %p418, %s417, 15
        %s420 = smul.addr %s419, 8
        %s421 = scalar_lea.vmem %s2, %s420
        %s422 = smul.u32 %s26, 4
        %s423 = sadd.s32 %s422, %s27
        %s424 = smul.u32 2, %s423
        %s425 = smul.u32 %s26, 4
        %s426 = sadd.s32 %s425, %s27
        %p427 = scmp.lt.s32.totalorder %s426, 7
        %s428 = scalar_select %p427, %s426, 7
        %s429 = scalar_lea.vmem %s3, %s428
        %s430 = smul.u32 %s26, 4
        %s431 = sadd.s32 %s430, %s27
        %p432 = scmp.eq.s32.totalorder %s27, 0
        // Predicated region
        $region53: #{tpu_custom_call.1} parent=51 // pred_check
          %p433 = pneg %p432
        $region54: #{tpu_custom_call.1} parent=51 // pred_check_branch
          %435 = sbr.rel (%p433) target = $region56
        $region55: #{tpu_custom_call.1} parent=51 // pred_region
          %436 = vst [vmem:[%s394] sm:$0xff] 0.0
          %437 = vst [vmem:[%s394 + $0x8] sm:$0xff] 0.0
        $region56: #{tpu_custom_call.1} parent=51 // pred_fallthru
          _
        %v438 = vld [vmem:[%s401] sm:$0xff]
        %v439 = vld [vmem:[%s401 + $0x8] sm:$0xff]
        %v440 = vld [vmem:[%s411] sm:$0xff]
        %v441 = vld [vmem:[%s411 + $0x8] sm:$0xff]
        %v442 = vld [vmem:[%s421] sm:$0xff]
        %v443 = vld [vmem:[%s421 + $0x8] sm:$0xff]
        %v444 = vld [vmem:[%s4] sm:$0xf]
        %vm445 = vcmask 31744
        %v447 = vsel %vm445, %v438, 0
        %v450 = vsel %vm445, %v439, 0
        %vm452 = vcmask 1043456
        %v454 = vsel %vm452, %v444, 0
        %456 = vmatprep.subr.mxu0 0.0
        %457 = vmatpush1.msra.mxu0 %v454
        %458 = vmatprep.subr.mxu0 0.0
        %459 = vmatpush1.msra.mxu0 0.0
        %460 = vmatprep.subr.mxu0 0.0
        %461 = vmatpush1.msra.mxu0 0.0
        %462 = vmatprep.subr.mxu0 0.0
        %463 = vmatpush1.msra.mxu0 0.0
        %464 = vmatprep.subr.mxu0 0.0
        %465 = vmatpush1.msra.mxu0 0.0
        %466 = vmatprep.subr.mxu0 0.0
        %467 = vmatpush1.msra.mxu0 0.0
        %468 = vmatprep.subr.mxu0 0.0
        %469 = vmatpush1.msra.mxu0 0.0
        %470 = vmatprep.subr.mxu0 0.0
        %471 = vmatpush1.msra.mxu0 0.0
        %472 = vmatprep.subr.mxu0 0.0
        %473 = vmatpush1.msra.mxu0 0.0
        %474 = vmatprep.subr.mxu0 0.0
        %475 = vmatpush1.msra.mxu0 0.0
        %476 = vmatprep.subr.mxu0 0.0
        %477 = vmatpush1.msra.mxu0 0.0
        %478 = vmatprep.subr.mxu0 0.0
        %479 = vmatpush1.msra.mxu0 0.0
        %480 = vmatprep.subr.mxu0 0.0
        %481 = vmatpush1.msra.mxu0 0.0
        %482 = vmatprep.subr.mxu0 0.0
        %483 = vmatpush1.msra.mxu0 0.0
        %484 = vmatprep.subr.mxu0 0.0
        %485 = vmatpush1.msra.mxu0 0.0
        %486 = vmatprep.subr.mxu0 0.0
        %487 = vmatpush1.msra.mxu0 0.0
        %488 = vmatprep.subr.mxu0 0.0
        %489 = vmatpush1.msra.mxu0 0.0
        %490 = vmatprep.subr.mxu0 0.0
        %491 = vmatpush1.msra.mxu0 0.0
        %492 = vmatprep.subr.mxu0 0.0
        %493 = vmatpush1.msra.mxu0 0.0
        %494 = vmatprep.subr.mxu0 0.0
        %495 = vmatpush1.msra.mxu0 0.0
        %496 = vmatprep.subr.mxu0 0.0
        %497 = vmatpush1.msra.mxu0 0.0
        %498 = vmatprep.subr.mxu0 0.0
        %499 = vmatpush1.msra.mxu0 0.0
        %500 = vmatprep.subr.mxu0 0.0
        %501 = vmatpush1.msra.mxu0 0.0
        %502 = vmatprep.subr.mxu0 0.0
        %503 = vmatpush1.msra.mxu0 0.0
        %504 = vmatprep.subr.mxu0 0.0
        %505 = vmatpush1.msra.mxu0 0.0
        %506 = vmatprep.subr.mxu0 0.0
        %507 = vmatpush1.msra.mxu0 0.0
        %508 = vmatprep.subr.mxu0 0.0
        %509 = vmatpush1.msra.mxu0 0.0
        %510 = vmatprep.subr.mxu0 0.0
        %511 = vmatpush1.msra.mxu0 0.0
        %512 = vmatprep.subr.mxu0 0.0
        %513 = vmatpush1.msra.mxu0 0.0
        %514 = vmatprep.subr.mxu0 0.0
        %515 = vmatpush1.msra.mxu0 0.0
        %516 = vmatprep.subr.mxu0 0.0
        %517 = vmatpush1.msra.mxu0 0.0
        %518 = vmatprep.subr.mxu0 0.0
        %519 = vmatpush1.msra.mxu0 0.0
        %520 = vmatprep.mubr.f32.mxu0 0.0
        %521 = vmatmul.mubr.f32.gmra.mrb[0].mxu0 %v447
        %v522 = vpop.f32.mrb[0].mxu0
        %v523 = vadd.f32 0.0, %v522
        %v524 = vpop.f32.mrb[0].mxu0
        %525 = vmatprep.mubr.f32.mxu0 0.0
        %526 = vmatmul.mubr.f32.gmra.mrb[0].mxu0 %v450
        %v527 = vpop.f32.mrb[0].mxu0
        %v528 = vadd.f32 0.0, %v527
        %v529 = vpop.f32.mrb[0].mxu0
        %530 = vdwg.mxu0
        %532 = vset.pattern.permute.xlu0 0
        %533 = vperm.xlu0 %532, %v440
        %v534 = vpop.permute.xlu0 %533
        %537 = vset.pattern.permute.xlu0 0
        %538 = vperm.xlu0 %537, %v441
        %v539 = vpop.permute.xlu0 %538
        %v541 = vmul.f32 %v534, %v523
        %v542 = vmul.f32 %v539, %v528
        %v543 = vadd.f32 %v541, 0.0
        %v544 = vadd.f32 %v542, 0.0
        %546 = vset.pattern.permute.xlu0 0
        %547 = vperm.xlu0 %546, %v442
        %v548 = vpop.permute.xlu0 %547
        %551 = vset.pattern.permute.xlu0 0
        %552 = vperm.xlu0 %551, %v443
        %v553 = vpop.permute.xlu0 %552
        %v555 = vmul.f32 %v548, %v523
        %v556 = vmul.f32 %v553, %v528
        %v557 = vadd.f32 %v555, 0.0
        %v558 = vadd.f32 %v556, 0.0
        %s559 = scalar_lea.vmem %s4, 4
        %v560 = vld [vmem:[%s559] sm:$0xf]
        %v562 = vsel %vm452, %v560, 0
        %564 = vmatprep.subr.mxu0 0.0
        %565 = vmatpush1.msra.mxu0 %v562
        %566 = vmatprep.subr.mxu0 0.0
        %567 = vmatpush1.msra.mxu0 0.0
        %568 = vmatprep.subr.mxu0 0.0
        %569 = vmatpush1.msra.mxu0 0.0
        %570 = vmatprep.subr.mxu0 0.0
        %571 = vmatpush1.msra.mxu0 0.0
        %572 = vmatprep.subr.mxu0 0.0
        %573 = vmatpush1.msra.mxu0 0.0
        %574 = vmatprep.subr.mxu0 0.0
        %575 = vmatpush1.msra.mxu0 0.0
        %576 = vmatprep.subr.mxu0 0.0
        %577 = vmatpush1.msra.mxu0 0.0
        %578 = vmatprep.subr.mxu0 0.0
        %579 = vmatpush1.msra.mxu0 0.0
        %580 = vmatprep.subr.mxu0 0.0
        %581 = vmatpush1.msra.mxu0 0.0
        %582 = vmatprep.subr.mxu0 0.0
        %583 = vmatpush1.msra.mxu0 0.0
        %584 = vmatprep.subr.mxu0 0.0
        %585 = vmatpush1.msra.mxu0 0.0
        %586 = vmatprep.subr.mxu0 0.0
        %587 = vmatpush1.msra.mxu0 0.0
        %588 = vmatprep.subr.mxu0 0.0
        %589 = vmatpush1.msra.mxu0 0.0
        %590 = vmatprep.subr.mxu0 0.0
        %591 = vmatpush1.msra.mxu0 0.0
        %592 = vmatprep.subr.mxu0 0.0
        %593 = vmatpush1.msra.mxu0 0.0
        %594 = vmatprep.subr.mxu0 0.0
        %595 = vmatpush1.msra.mxu0 0.0
        %596 = vmatprep.subr.mxu0 0.0
        %597 = vmatpush1.msra.mxu0 0.0
        %598 = vmatprep.subr.mxu0 0.0
        %599 = vmatpush1.msra.mxu0 0.0
        %600 = vmatprep.subr.mxu0 0.0
        %601 = vmatpush1.msra.mxu0 0.0
        %602 = vmatprep.subr.mxu0 0.0
        %603 = vmatpush1.msra.mxu0 0.0
        %604 = vmatprep.subr.mxu0 0.0
        %605 = vmatpush1.msra.mxu0 0.0
        %606 = vmatprep.subr.mxu0 0.0
        %607 = vmatpush1.msra.mxu0 0.0
        %608 = vmatprep.subr.mxu0 0.0
        %609 = vmatpush1.msra.mxu0 0.0
        %610 = vmatprep.subr.mxu0 0.0
        %611 = vmatpush1.msra.mxu0 0.0
        %612 = vmatprep.subr.mxu0 0.0
        %613 = vmatpush1.msra.mxu0 0.0
        %614 = vmatprep.subr.mxu0 0.0
        %615 = vmatpush1.msra.mxu0 0.0
        %616 = vmatprep.subr.mxu0 0.0
        %617 = vmatpush1.msra.mxu0 0.0
        %618 = vmatprep.subr.mxu0 0.0
        %619 = vmatpush1.msra.mxu0 0.0
        %620 = vmatprep.subr.mxu0 0.0
        %621 = vmatpush1.msra.mxu0 0.0
        %622 = vmatprep.subr.mxu0 0.0
        %623 = vmatpush1.msra.mxu0 0.0
        %624 = vmatprep.subr.mxu0 0.0
        %625 = vmatpush1.msra.mxu0 0.0
        %626 = vmatprep.subr.mxu0 0.0
        %627 = vmatpush1.msra.mxu0 0.0
        %628 = vmatprep.mubr.f32.mxu0 0.0
        %629 = vmatmul.mubr.f32.gmra.mrb[0].mxu0 %v447
        %v630 = vpop.f32.mrb[0].mxu0
        %v631 = vadd.f32 0.0, %v630
        %v632 = vpop.f32.mrb[0].mxu0
        %633 = vmatprep.mubr.f32.mxu0 0.0
        %634 = vmatmul.mubr.f32.gmra.mrb[0].mxu0 %v450
        %v635 = vpop.f32.mrb[0].mxu0
        %v636 = vadd.f32 0.0, %v635
        %v637 = vpop.f32.mrb[0].mxu0
        %638 = vdwg.mxu0
        %639 = vset.pattern.permute.xlu0 1
        %640 = vperm.xlu0 %639, %v440
        %v641 = vpop.permute.xlu0 %640
        %643 = vset.pattern.permute.xlu0 1
        %644 = vperm.xlu0 %643, %v441
        %v645 = vpop.permute.xlu0 %644
        %v647 = vmul.f32 %v641, %v631
        %v648 = vmul.f32 %v645, %v636
        %v649 = vadd.f32 %v543, %v647
        %v650 = vadd.f32 %v544, %v648
        %651 = vset.pattern.permute.xlu0 1
        %652 = vperm.xlu0 %651, %v442
        %v653 = vpop.permute.xlu0 %652
        %655 = vset.pattern.permute.xlu0 1
        %656 = vperm.xlu0 %655, %v443
        %v657 = vpop.permute.xlu0 %656
        %v659 = vmul.f32 %v653, %v631
        %v660 = vmul.f32 %v657, %v636
        %v661 = vadd.f32 %v557, %v659
        %v662 = vadd.f32 %v558, %v660
        %s663 = scalar_lea.vmem %s4, 8
        %v664 = vld [vmem:[%s663] sm:$0xf]
        %v666 = vsel %vm452, %v664, 0
        %668 = vmatprep.subr.mxu0 0.0
        %669 = vmatpush1.msra.mxu0 %v666
        %670 = vmatprep.subr.mxu0 0.0
        %671 = vmatpush1.msra.mxu0 0.0
        %672 = vmatprep.subr.mxu0 0.0
        %673 = vmatpush1.msra.mxu0 0.0
        %674 = vmatprep.subr.mxu0 0.0
        %675 = vmatpush1.msra.mxu0 0.0
        %676 = vmatprep.subr.mxu0 0.0
        %677 = vmatpush1.msra.mxu0 0.0
        %678 = vmatprep.subr.mxu0 0.0
        %679 = vmatpush1.msra.mxu0 0.0
        %680 = vmatprep.subr.mxu0 0.0
        %681 = vmatpush1.msra.mxu0 0.0
        %682 = vmatprep.subr.mxu0 0.0
        %683 = vmatpush1.msra.mxu0 0.0
        %684 = vmatprep.subr.mxu0 0.0
        %685 = vmatpush1.msra.mxu0 0.0
        %686 = vmatprep.subr.mxu0 0.0
        %687 = vmatpush1.msra.mxu0 0.0
        %688 = vmatprep.subr.mxu0 0.0
        %689 = vmatpush1.msra.mxu0 0.0
        %690 = vmatprep.subr.mxu0 0.0
        %691 = vmatpush1.msra.mxu0 0.0
        %692 = vmatprep.subr.mxu0 0.0
        %693 = vmatpush1.msra.mxu0 0.0
        %694 = vmatprep.subr.mxu0 0.0
        %695 = vmatpush1.msra.mxu0 0.0
        %696 = vmatprep.subr.mxu0 0.0
        %697 = vmatpush1.msra.mxu0 0.0
        %698 = vmatprep.subr.mxu0 0.0
        %699 = vmatpush1.msra.mxu0 0.0
        %700 = vmatprep.subr.mxu0 0.0
        %701 = vmatpush1.msra.mxu0 0.0
        %702 = vmatprep.subr.mxu0 0.0
        %703 = vmatpush1.msra.mxu0 0.0
        %704 = vmatprep.subr.mxu0 0.0
        %705 = vmatpush1.msra.mxu0 0.0
        %706 = vmatprep.subr.mxu0 0.0
        %707 = vmatpush1.msra.mxu0 0.0
        %708 = vmatprep.subr.mxu0 0.0
        %709 = vmatpush1.msra.mxu0 0.0
        %710 = vmatprep.subr.mxu0 0.0
        %711 = vmatpush1.msra.mxu0 0.0
        %712 = vmatprep.subr.mxu0 0.0
        %713 = vmatpush1.msra.mxu0 0.0
        %714 = vmatprep.subr.mxu0 0.0
        %715 = vmatpush1.msra.mxu0 0.0
        %716 = vmatprep.subr.mxu0 0.0
        %717 = vmatpush1.msra.mxu0 0.0
        %718 = vmatprep.subr.mxu0 0.0
        %719 = vmatpush1.msra.mxu0 0.0
        %720 = vmatprep.subr.mxu0 0.0
        %721 = vmatpush1.msra.mxu0 0.0
        %722 = vmatprep.subr.mxu0 0.0
        %723 = vmatpush1.msra.mxu0 0.0
        %724 = vmatprep.subr.mxu0 0.0
        %725 = vmatpush1.msra.mxu0 0.0
        %726 = vmatprep.subr.mxu0 0.0
        %727 = vmatpush1.msra.mxu0 0.0
        %728 = vmatprep.subr.mxu0 0.0
        %729 = vmatpush1.msra.mxu0 0.0
        %730 = vmatprep.subr.mxu0 0.0
        %731 = vmatpush1.msra.mxu0 0.0
        %732 = vmatprep.mubr.f32.mxu0 0.0
        %733 = vmatmul.mubr.f32.gmra.mrb[0].mxu0 %v447
        %v734 = vpop.f32.mrb[0].mxu0
        %v735 = vadd.f32 0.0, %v734
        %v736 = vpop.f32.mrb[0].mxu0
        %737 = vmatprep.mubr.f32.mxu0 0.0
        %738 = vmatmul.mubr.f32.gmra.mrb[0].mxu0 %v450
        %v739 = vpop.f32.mrb[0].mxu0
        %v740 = vadd.f32 0.0, %v739
        %v741 = vpop.f32.mrb[0].mxu0
        %742 = vdwg.mxu0
        %743 = vset.pattern.permute.xlu0 2
        %744 = vperm.xlu0 %743, %v440
        %v745 = vpop.permute.xlu0 %744
        %747 = vset.pattern.permute.xlu0 2
        %748 = vperm.xlu0 %747, %v441
        %v749 = vpop.permute.xlu0 %748
        %v751 = vmul.f32 %v745, %v735
        %v752 = vmul.f32 %v749, %v740
        %v753 = vadd.f32 %v649, %v751
        %v754 = vadd.f32 %v650, %v752
        %755 = vset.pattern.permute.xlu0 2
        %756 = vperm.xlu0 %755, %v442
        %v757 = vpop.permute.xlu0 %756
        %759 = vset.pattern.permute.xlu0 2
        %760 = vperm.xlu0 %759, %v443
        %v761 = vpop.permute.xlu0 %760
        %v763 = vmul.f32 %v757, %v735
        %v764 = vmul.f32 %v761, %v740
        %v765 = vadd.f32 %v661, %v763
        %v766 = vadd.f32 %v662, %v764
        %s767 = scalar_lea.vmem %s4, 12
        %v768 = vld [vmem:[%s767] sm:$0xf]
        %v770 = vsel %vm452, %v768, 0
        %772 = vmatprep.subr.mxu0 0.0
        %773 = vmatpush1.msra.mxu0 %v770
        %774 = vmatprep.subr.mxu0 0.0
        %775 = vmatpush1.msra.mxu0 0.0
        %776 = vmatprep.subr.mxu0 0.0
        %777 = vmatpush1.msra.mxu0 0.0
        %778 = vmatprep.subr.mxu0 0.0
        %779 = vmatpush1.msra.mxu0 0.0
        %780 = vmatprep.subr.mxu0 0.0
        %781 = vmatpush1.msra.mxu0 0.0
        %782 = vmatprep.subr.mxu0 0.0
        %783 = vmatpush1.msra.mxu0 0.0
        %784 = vmatprep.subr.mxu0 0.0
        %785 = vmatpush1.msra.mxu0 0.0
        %786 = vmatprep.subr.mxu0 0.0
        %787 = vmatpush1.msra.mxu0 0.0
        %788 = vmatprep.subr.mxu0 0.0
        %789 = vmatpush1.msra.mxu0 0.0
        %790 = vmatprep.subr.mxu0 0.0
        %791 = vmatpush1.msra.mxu0 0.0
        %792 = vmatprep.subr.mxu0 0.0
        %793 = vmatpush1.msra.mxu0 0.0
        %794 = vmatprep.subr.mxu0 0.0
        %795 = vmatpush1.msra.mxu0 0.0
        %796 = vmatprep.subr.mxu0 0.0
        %797 = vmatpush1.msra.mxu0 0.0
        %798 = vmatprep.subr.mxu0 0.0
        %799 = vmatpush1.msra.mxu0 0.0
        %800 = vmatprep.subr.mxu0 0.0
        %801 = vmatpush1.msra.mxu0 0.0
        %802 = vmatprep.subr.mxu0 0.0
        %803 = vmatpush1.msra.mxu0 0.0
        %804 = vmatprep.subr.mxu0 0.0
        %805 = vmatpush1.msra.mxu0 0.0
        %806 = vmatprep.subr.mxu0 0.0
        %807 = vmatpush1.msra.mxu0 0.0
        %808 = vmatprep.subr.mxu0 0.0
        %809 = vmatpush1.msra.mxu0 0.0
        %810 = vmatprep.subr.mxu0 0.0
        %811 = vmatpush1.msra.mxu0 0.0
        %812 = vmatprep.subr.mxu0 0.0
        %813 = vmatpush1.msra.mxu0 0.0
        %814 = vmatprep.subr.mxu0 0.0
        %815 = vmatpush1.msra.mxu0 0.0
        %816 = vmatprep.subr.mxu0 0.0
        %817 = vmatpush1.msra.mxu0 0.0
        %818 = vmatprep.subr.mxu0 0.0
        %819 = vmatpush1.msra.mxu0 0.0
        %820 = vmatprep.subr.mxu0 0.0
        %821 = vmatpush1.msra.mxu0 0.0
        %822 = vmatprep.subr.mxu0 0.0
        %823 = vmatpush1.msra.mxu0 0.0
        %824 = vmatprep.subr.mxu0 0.0
        %825 = vmatpush1.msra.mxu0 0.0
        %826 = vmatprep.subr.mxu0 0.0
        %827 = vmatpush1.msra.mxu0 0.0
        %828 = vmatprep.subr.mxu0 0.0
        %829 = vmatpush1.msra.mxu0 0.0
        %830 = vmatprep.subr.mxu0 0.0
        %831 = vmatpush1.msra.mxu0 0.0
        %832 = vmatprep.subr.mxu0 0.0
        %833 = vmatpush1.msra.mxu0 0.0
        %834 = vmatprep.subr.mxu0 0.0
        %835 = vmatpush1.msra.mxu0 0.0
        %836 = vmatprep.mubr.f32.mxu0 0.0
        %837 = vmatmul.mubr.f32.gmra.mrb[0].mxu0 %v447
        %v838 = vpop.f32.mrb[0].mxu0
        %v839 = vadd.f32 0.0, %v838
        %v840 = vpop.f32.mrb[0].mxu0
        %841 = vmatprep.mubr.f32.mxu0 0.0
        %842 = vmatmul.mubr.f32.gmra.mrb[0].mxu0 %v450
        %v843 = vpop.f32.mrb[0].mxu0
        %v844 = vadd.f32 0.0, %v843
        %v845 = vpop.f32.mrb[0].mxu0
        %846 = vdwg.mxu0
        %847 = vset.pattern.permute.xlu0 3
        %848 = vperm.xlu0 %847, %v440
        %v849 = vpop.permute.xlu0 %848
        %851 = vset.pattern.permute.xlu0 3
        %852 = vperm.xlu0 %851, %v441
        %v853 = vpop.permute.xlu0 %852
        %v855 = vmul.f32 %v849, %v839
        %v856 = vmul.f32 %v853, %v844
        %v857 = vadd.f32 %v753, %v855
        %v858 = vadd.f32 %v754, %v856
        %859 = vset.pattern.permute.xlu0 3
        %860 = vperm.xlu0 %859, %v442
        %v861 = vpop.permute.xlu0 %860
        %863 = vset.pattern.permute.xlu0 3
        %864 = vperm.xlu0 %863, %v443
        %v865 = vpop.permute.xlu0 %864
        %v867 = vmul.f32 %v861, %v839
        %v868 = vmul.f32 %v865, %v844
        %v869 = vadd.f32 %v765, %v867
        %v870 = vadd.f32 %v766, %v868
        %s871 = scalar_lea.vmem %s4, 16
        %v872 = vld [vmem:[%s871] sm:$0xf]
        %v874 = vsel %vm452, %v872, 0
        %876 = vmatprep.subr.mxu0 0.0
        %877 = vmatpush1.msra.mxu0 %v874
        %878 = vmatprep.subr.mxu0 0.0
        %879 = vmatpush1.msra.mxu0 0.0
        %880 = vmatprep.subr.mxu0 0.0
        %881 = vmatpush1.msra.mxu0 0.0
        %882 = vmatprep.subr.mxu0 0.0
        %883 = vmatpush1.msra.mxu0 0.0
        %884 = vmatprep.subr.mxu0 0.0
        %885 = vmatpush1.msra.mxu0 0.0
        %886 = vmatprep.subr.mxu0 0.0
        %887 = vmatpush1.msra.mxu0 0.0
        %888 = vmatprep.subr.mxu0 0.0
        %889 = vmatpush1.msra.mxu0 0.0
        %890 = vmatprep.subr.mxu0 0.0
        %891 = vmatpush1.msra.mxu0 0.0
        %892 = vmatprep.subr.mxu0 0.0
        %893 = vmatpush1.msra.mxu0 0.0
        %894 = vmatprep.subr.mxu0 0.0
        %895 = vmatpush1.msra.mxu0 0.0
        %896 = vmatprep.subr.mxu0 0.0
        %897 = vmatpush1.msra.mxu0 0.0
        %898 = vmatprep.subr.mxu0 0.0
        %899 = vmatpush1.msra.mxu0 0.0
        %900 = vmatprep.subr.mxu0 0.0
        %901 = vmatpush1.msra.mxu0 0.0
        %902 = vmatprep.subr.mxu0 0.0
        %903 = vmatpush1.msra.mxu0 0.0
        %904 = vmatprep.subr.mxu0 0.0
        %905 = vmatpush1.msra.mxu0 0.0
        %906 = vmatprep.subr.mxu0 0.0
        %907 = vmatpush1.msra.mxu0 0.0
        %908 = vmatprep.subr.mxu0 0.0
        %909 = vmatpush1.msra.mxu0 0.0
        %910 = vmatprep.subr.mxu0 0.0
        %911 = vmatpush1.msra.mxu0 0.0
        %912 = vmatprep.subr.mxu0 0.0
        %913 = vmatpush1.msra.mxu0 0.0
        %914 = vmatprep.subr.mxu0 0.0
        %915 = vmatpush1.msra.mxu0 0.0
        %916 = vmatprep.subr.mxu0 0.0
        %917 = vmatpush1.msra.mxu0 0.0
        %918 = vmatprep.subr.mxu0 0.0
        %919 = vmatpush1.msra.mxu0 0.0
        %920 = vmatprep.subr.mxu0 0.0
        %921 = vmatpush1.msra.mxu0 0.0
        %922 = vmatprep.subr.mxu0 0.0
        %923 = vmatpush1.msra.mxu0 0.0
        %924 = vmatprep.subr.mxu0 0.0
        %925 = vmatpush1.msra.mxu0 0.0
        %926 = vmatprep.subr.mxu0 0.0
        %927 = vmatpush1.msra.mxu0 0.0
        %928 = vmatprep.subr.mxu0 0.0
        %929 = vmatpush1.msra.mxu0 0.0
        %930 = vmatprep.subr.mxu0 0.0
        %931 = vmatpush1.msra.mxu0 0.0
        %932 = vmatprep.subr.mxu0 0.0
        %933 = vmatpush1.msra.mxu0 0.0
        %934 = vmatprep.subr.mxu0 0.0
        %935 = vmatpush1.msra.mxu0 0.0
        %936 = vmatprep.subr.mxu0 0.0
        %937 = vmatpush1.msra.mxu0 0.0
        %938 = vmatprep.subr.mxu0 0.0
        %939 = vmatpush1.msra.mxu0 0.0
        %940 = vmatprep.mubr.f32.mxu0 0.0
        %941 = vmatmul.mubr.f32.gmra.mrb[0].mxu0 %v447
        %v942 = vpop.f32.mrb[0].mxu0
        %v943 = vadd.f32 0.0, %v942
        %v944 = vpop.f32.mrb[0].mxu0
        %945 = vmatprep.mubr.f32.mxu0 0.0
        %946 = vmatmul.mubr.f32.gmra.mrb[0].mxu0 %v450
        %v947 = vpop.f32.mrb[0].mxu0
        %v948 = vadd.f32 0.0, %v947
        %v949 = vpop.f32.mrb[0].mxu0
        %950 = vdwg.mxu0
        %951 = vset.pattern.permute.xlu0 4
        %952 = vperm.xlu0 %951, %v440
        %v953 = vpop.permute.xlu0 %952
        %955 = vset.pattern.permute.xlu0 4
        %956 = vperm.xlu0 %955, %v441
        %v957 = vpop.permute.xlu0 %956
        %v959 = vmul.f32 %v953, %v943
        %v960 = vmul.f32 %v957, %v948
        %v961 = vadd.f32 %v857, %v959
        %v962 = vadd.f32 %v858, %v960
        %963 = vset.pattern.permute.xlu0 4
        %964 = vperm.xlu0 %963, %v442
        %v965 = vpop.permute.xlu0 %964
        %967 = vset.pattern.permute.xlu0 4
        %968 = vperm.xlu0 %967, %v443
        %v969 = vpop.permute.xlu0 %968
        %v971 = vmul.f32 %v965, %v943
        %v972 = vmul.f32 %v969, %v948
        %v973 = vadd.f32 %v869, %v971
        %v974 = vadd.f32 %v870, %v972
        %s975 = scalar_lea.vmem %s4, 20
        %v976 = vld [vmem:[%s975] sm:$0xf]
        %v978 = vsel %vm452, %v976, 0
        %980 = vmatprep.subr.mxu0 0.0
        %981 = vmatpush1.msra.mxu0 %v978
        %982 = vmatprep.subr.mxu0 0.0
        %983 = vmatpush1.msra.mxu0 0.0
        %984 = vmatprep.subr.mxu0 0.0
        %985 = vmatpush1.msra.mxu0 0.0
        %986 = vmatprep.subr.mxu0 0.0
        %987 = vmatpush1.msra.mxu0 0.0
        %988 = vmatprep.subr.mxu0 0.0
        %989 = vmatpush1.msra.mxu0 0.0
        %990 = vmatprep.subr.mxu0 0.0
        %991 = vmatpush1.msra.mxu0 0.0
        %992 = vmatprep.subr.mxu0 0.0
        %993 = vmatpush1.msra.mxu0 0.0
        %994 = vmatprep.subr.mxu0 0.0
        %995 = vmatpush1.msra.mxu0 0.0
        %996 = vmatprep.subr.mxu0 0.0
        %997 = vmatpush1.msra.mxu0 0.0
        %998 = vmatprep.subr.mxu0 0.0
        %999 = vmatpush1.msra.mxu0 0.0
        %1000 = vmatprep.subr.mxu0 0.0
        %1001 = vmatpush1.msra.mxu0 0.0
        %1002 = vmatprep.subr.mxu0 0.0
        %1003 = vmatpush1.msra.mxu0 0.0
        %1004 = vmatprep.subr.mxu0 0.0
        %1005 = vmatpush1.msra.mxu0 0.0
        %1006 = vmatprep.subr.mxu0 0.0
        %1007 = vmatpush1.msra.mxu0 0.0
        %1008 = vmatprep.subr.mxu0 0.0
        %1009 = vmatpush1.msra.mxu0 0.0
        %1010 = vmatprep.subr.mxu0 0.0
        %1011 = vmatpush1.msra.mxu0 0.0
        %1012 = vmatprep.subr.mxu0 0.0
        %1013 = vmatpush1.msra.mxu0 0.0
        %1014 = vmatprep.subr.mxu0 0.0
        %1015 = vmatpush1.msra.mxu0 0.0
        %1016 = vmatprep.subr.mxu0 0.0
        %1017 = vmatpush1.msra.mxu0 0.0
        %1018 = vmatprep.subr.mxu0 0.0
        %1019 = vmatpush1.msra.mxu0 0.0
        %1020 = vmatprep.subr.mxu0 0.0
        %1021 = vmatpush1.msra.mxu0 0.0
        %1022 = vmatprep.subr.mxu0 0.0
        %1023 = vmatpush1.msra.mxu0 0.0
        %1024 = vmatprep.subr.mxu0 0.0
        %1025 = vmatpush1.msra.mxu0 0.0
        %1026 = vmatprep.subr.mxu0 0.0
        %1027 = vmatpush1.msra.mxu0 0.0
        %1028 = vmatprep.subr.mxu0 0.0
        %1029 = vmatpush1.msra.mxu0 0.0
        %1030 = vmatprep.subr.mxu0 0.0
        %1031 = vmatpush1.msra.mxu0 0.0
        %1032 = vmatprep.subr.mxu0 0.0
        %1033 = vmatpush1.msra.mxu0 0.0
        %1034 = vmatprep.subr.mxu0 0.0
        %1035 = vmatpush1.msra.mxu0 0.0
        %1036 = vmatprep.subr.mxu0 0.0
        %1037 = vmatpush1.msra.mxu0 0.0
        %1038 = vmatprep.subr.mxu0 0.0
        %1039 = vmatpush1.msra.mxu0 0.0
        %1040 = vmatprep.subr.mxu0 0.0
        %1041 = vmatpush1.msra.mxu0 0.0
        %1042 = vmatprep.subr.mxu0 0.0
        %1043 = vmatpush1.msra.mxu0 0.0
        %1044 = vmatprep.mubr.f32.mxu0 0.0
        %1045 = vmatmul.mubr.f32.gmra.mrb[0].mxu0 %v447
        %v1046 = vpop.f32.mrb[0].mxu0
        %v1047 = vadd.f32 0.0, %v1046
        %v1048 = vpop.f32.mrb[0].mxu0
        %1049 = vmatprep.mubr.f32.mxu0 0.0
        %1050 = vmatmul.mubr.f32.gmra.mrb[0].mxu0 %v450
        %v1051 = vpop.f32.mrb[0].mxu0
        %v1052 = vadd.f32 0.0, %v1051
        %v1053 = vpop.f32.mrb[0].mxu0
        %1054 = vdwg.mxu0
        %1055 = vset.pattern.permute.xlu0 5
        %1056 = vperm.xlu0 %1055, %v440
        %v1057 = vpop.permute.xlu0 %1056
        %1059 = vset.pattern.permute.xlu0 5
        %1060 = vperm.xlu0 %1059, %v441
        %v1061 = vpop.permute.xlu0 %1060
        %v1063 = vmul.f32 %v1057, %v1047
        %v1064 = vmul.f32 %v1061, %v1052
        %v1065 = vadd.f32 %v961, %v1063
        %v1066 = vadd.f32 %v962, %v1064
        %1067 = vset.pattern.permute.xlu0 5
        %1068 = vperm.xlu0 %1067, %v442
        %v1069 = vpop.permute.xlu0 %1068
        %1071 = vset.pattern.permute.xlu0 5
        %1072 = vperm.xlu0 %1071, %v443
        %v1073 = vpop.permute.xlu0 %1072
        %v1075 = vmul.f32 %v1069, %v1047
        %v1076 = vmul.f32 %v1073, %v1052
        %v1077 = vadd.f32 %v973, %v1075
        %v1078 = vadd.f32 %v974, %v1076
        %s1079 = scalar_lea.vmem %s4, 24
        %v1080 = vld [vmem:[%s1079] sm:$0xf]
        %v1082 = vsel %vm452, %v1080, 0
        %1084 = vmatprep.subr.mxu0 0.0
        %1085 = vmatpush1.msra.mxu0 %v1082
        %1086 = vmatprep.subr.mxu0 0.0
        %1087 = vmatpush1.msra.mxu0 0.0
        %1088 = vmatprep.subr.mxu0 0.0
        %1089 = vmatpush1.msra.mxu0 0.0
        %1090 = vmatprep.subr.mxu0 0.0
        %1091 = vmatpush1.msra.mxu0 0.0
        %1092 = vmatprep.subr.mxu0 0.0
        %1093 = vmatpush1.msra.mxu0 0.0
        %1094 = vmatprep.subr.mxu0 0.0
        %1095 = vmatpush1.msra.mxu0 0.0
        %1096 = vmatprep.subr.mxu0 0.0
        %1097 = vmatpush1.msra.mxu0 0.0
        %1098 = vmatprep.subr.mxu0 0.0
        %1099 = vmatpush1.msra.mxu0 0.0
        %1100 = vmatprep.subr.mxu0 0.0
        %1101 = vmatpush1.msra.mxu0 0.0
        %1102 = vmatprep.subr.mxu0 0.0
        %1103 = vmatpush1.msra.mxu0 0.0
        %1104 = vmatprep.subr.mxu0 0.0
        %1105 = vmatpush1.msra.mxu0 0.0
        %1106 = vmatprep.subr.mxu0 0.0
        %1107 = vmatpush1.msra.mxu0 0.0
        %1108 = vmatprep.subr.mxu0 0.0
        %1109 = vmatpush1.msra.mxu0 0.0
        %1110 = vmatprep.subr.mxu0 0.0
        %1111 = vmatpush1.msra.mxu0 0.0
        %1112 = vmatprep.subr.mxu0 0.0
        %1113 = vmatpush1.msra.mxu0 0.0
        %1114 = vmatprep.subr.mxu0 0.0
        %1115 = vmatpush1.msra.mxu0 0.0
        %1116 = vmatprep.subr.mxu0 0.0
        %1117 = vmatpush1.msra.mxu0 0.0
        %1118 = vmatprep.subr.mxu0 0.0
        %1119 = vmatpush1.msra.mxu0 0.0
        %1120 = vmatprep.subr.mxu0 0.0
        %1121 = vmatpush1.msra.mxu0 0.0
        %1122 = vmatprep.subr.mxu0 0.0
        %1123 = vmatpush1.msra.mxu0 0.0
        %1124 = vmatprep.subr.mxu0 0.0
        %1125 = vmatpush1.msra.mxu0 0.0
        %1126 = vmatprep.subr.mxu0 0.0
        %1127 = vmatpush1.msra.mxu0 0.0
        %1128 = vmatprep.subr.mxu0 0.0
        %1129 = vmatpush1.msra.mxu0 0.0
        %1130 = vmatprep.subr.mxu0 0.0
        %1131 = vmatpush1.msra.mxu0 0.0
        %1132 = vmatprep.subr.mxu0 0.0
        %1133 = vmatpush1.msra.mxu0 0.0
        %1134 = vmatprep.subr.mxu0 0.0
        %1135 = vmatpush1.msra.mxu0 0.0
        %1136 = vmatprep.subr.mxu0 0.0
        %1137 = vmatpush1.msra.mxu0 0.0
        %1138 = vmatprep.subr.mxu0 0.0
        %1139 = vmatpush1.msra.mxu0 0.0
        %1140 = vmatprep.subr.mxu0 0.0
        %1141 = vmatpush1.msra.mxu0 0.0
        %1142 = vmatprep.subr.mxu0 0.0
        %1143 = vmatpush1.msra.mxu0 0.0
        %1144 = vmatprep.subr.mxu0 0.0
        %1145 = vmatpush1.msra.mxu0 0.0
        %1146 = vmatprep.subr.mxu0 0.0
        %1147 = vmatpush1.msra.mxu0 0.0
        %1148 = vmatprep.mubr.f32.mxu0 0.0
        %1149 = vmatmul.mubr.f32.gmra.mrb[0].mxu0 %v447
        %v1150 = vpop.f32.mrb[0].mxu0
        %v1151 = vadd.f32 0.0, %v1150
        %v1152 = vpop.f32.mrb[0].mxu0
        %1153 = vmatprep.mubr.f32.mxu0 0.0
        %1154 = vmatmul.mubr.f32.gmra.mrb[0].mxu0 %v450
        %v1155 = vpop.f32.mrb[0].mxu0
        %v1156 = vadd.f32 0.0, %v1155
        %v1157 = vpop.f32.mrb[0].mxu0
        %1158 = vdwg.mxu0
        %1159 = vset.pattern.permute.xlu0 6
        %1160 = vperm.xlu0 %1159, %v440
        %v1161 = vpop.permute.xlu0 %1160
        %1163 = vset.pattern.permute.xlu0 6
        %1164 = vperm.xlu0 %1163, %v441
        %v1165 = vpop.permute.xlu0 %1164
        %v1167 = vmul.f32 %v1161, %v1151
        %v1168 = vmul.f32 %v1165, %v1156
        %v1169 = vadd.f32 %v1065, %v1167
        %v1170 = vadd.f32 %v1066, %v1168
        %1171 = vset.pattern.permute.xlu0 6
        %1172 = vperm.xlu0 %1171, %v442
        %v1173 = vpop.permute.xlu0 %1172
        %1175 = vset.pattern.permute.xlu0 6
        %1176 = vperm.xlu0 %1175, %v443
        %v1177 = vpop.permute.xlu0 %1176
        %v1179 = vmul.f32 %v1173, %v1151
        %v1180 = vmul.f32 %v1177, %v1156
        %v1181 = vadd.f32 %v1077, %v1179
        %v1182 = vadd.f32 %v1078, %v1180
        %s1183 = scalar_lea.vmem %s4, 28
        %v1184 = vld [vmem:[%s1183] sm:$0xf]
        %v1186 = vsel %vm452, %v1184, 0
        %1188 = vmatprep.subr.mxu0 0.0
        %1189 = vmatpush1.msra.mxu0 %v1186
        %1190 = vmatprep.subr.mxu0 0.0
        %1191 = vmatpush1.msra.mxu0 0.0
        %1192 = vmatprep.subr.mxu0 0.0
        %1193 = vmatpush1.msra.mxu0 0.0
        %1194 = vmatprep.subr.mxu0 0.0
        %1195 = vmatpush1.msra.mxu0 0.0
        %1196 = vmatprep.subr.mxu0 0.0
        %1197 = vmatpush1.msra.mxu0 0.0
        %1198 = vmatprep.subr.mxu0 0.0
        %1199 = vmatpush1.msra.mxu0 0.0
        %1200 = vmatprep.subr.mxu0 0.0
        %1201 = vmatpush1.msra.mxu0 0.0
        %1202 = vmatprep.subr.mxu0 0.0
        %1203 = vmatpush1.msra.mxu0 0.0
        %1204 = vmatprep.subr.mxu0 0.0
        %1205 = vmatpush1.msra.mxu0 0.0
        %1206 = vmatprep.subr.mxu0 0.0
        %1207 = vmatpush1.msra.mxu0 0.0
        %1208 = vmatprep.subr.mxu0 0.0
        %1209 = vmatpush1.msra.mxu0 0.0
        %1210 = vmatprep.subr.mxu0 0.0
        %1211 = vmatpush1.msra.mxu0 0.0
        %1212 = vmatprep.subr.mxu0 0.0
        %1213 = vmatpush1.msra.mxu0 0.0
        %1214 = vmatprep.subr.mxu0 0.0
        %1215 = vmatpush1.msra.mxu0 0.0
        %1216 = vmatprep.subr.mxu0 0.0
        %1217 = vmatpush1.msra.mxu0 0.0
        %1218 = vmatprep.subr.mxu0 0.0
        %1219 = vmatpush1.msra.mxu0 0.0
        %1220 = vmatprep.subr.mxu0 0.0
        %1221 = vmatpush1.msra.mxu0 0.0
        %1222 = vmatprep.subr.mxu0 0.0
        %1223 = vmatpush1.msra.mxu0 0.0
        %1224 = vmatprep.subr.mxu0 0.0
        %1225 = vmatpush1.msra.mxu0 0.0
        %1226 = vmatprep.subr.mxu0 0.0
        %1227 = vmatpush1.msra.mxu0 0.0
        %1228 = vmatprep.subr.mxu0 0.0
        %1229 = vmatpush1.msra.mxu0 0.0
        %1230 = vmatprep.subr.mxu0 0.0
        %1231 = vmatpush1.msra.mxu0 0.0
        %1232 = vmatprep.subr.mxu0 0.0
        %1233 = vmatpush1.msra.mxu0 0.0
        %1234 = vmatprep.subr.mxu0 0.0
        %1235 = vmatpush1.msra.mxu0 0.0
        %1236 = vmatprep.subr.mxu0 0.0
        %1237 = vmatpush1.msra.mxu0 0.0
        %1238 = vmatprep.subr.mxu0 0.0
        %1239 = vmatpush1.msra.mxu0 0.0
        %1240 = vmatprep.subr.mxu0 0.0
        %1241 = vmatpush1.msra.mxu0 0.0
        %1242 = vmatprep.subr.mxu0 0.0
        %1243 = vmatpush1.msra.mxu0 0.0
        %1244 = vmatprep.subr.mxu0 0.0
        %1245 = vmatpush1.msra.mxu0 0.0
        %1246 = vmatprep.subr.mxu0 0.0
        %1247 = vmatpush1.msra.mxu0 0.0
        %1248 = vmatprep.subr.mxu0 0.0
        %1249 = vmatpush1.msra.mxu0 0.0
        %1250 = vmatprep.subr.mxu0 0.0
        %1251 = vmatpush1.msra.mxu0 0.0
        %1252 = vmatprep.mubr.f32.mxu0 0.0
        %1253 = vmatmul.mubr.f32.gmra.mrb[0].mxu0 %v447
        %v1254 = vpop.f32.mrb[0].mxu0
        %v1255 = vadd.f32 0.0, %v1254
        %v1256 = vpop.f32.mrb[0].mxu0
        %1257 = vmatprep.mubr.f32.mxu0 0.0
        %1258 = vmatmul.mubr.f32.gmra.mrb[0].mxu0 %v450
        %v1259 = vpop.f32.mrb[0].mxu0
        %v1260 = vadd.f32 0.0, %v1259
        %v1261 = vpop.f32.mrb[0].mxu0
        %1262 = vdwg.mxu0
        %1263 = vset.pattern.permute.xlu0 7
        %1264 = vperm.xlu0 %1263, %v440
        %v1265 = vpop.permute.xlu0 %1264
        %1267 = vset.pattern.permute.xlu0 7
        %1268 = vperm.xlu0 %1267, %v441
        %v1269 = vpop.permute.xlu0 %1268
        %v1271 = vmul.f32 %v1265, %v1255
        %v1272 = vmul.f32 %v1269, %v1260
        %v1273 = vadd.f32 %v1169, %v1271
        %v1274 = vadd.f32 %v1170, %v1272
        %1275 = vset.pattern.permute.xlu0 7
        %1276 = vperm.xlu0 %1275, %v442
        %v1277 = vpop.permute.xlu0 %1276
        %1279 = vset.pattern.permute.xlu0 7
        %1280 = vperm.xlu0 %1279, %v443
        %v1281 = vpop.permute.xlu0 %1280
        %v1283 = vmul.f32 %v1277, %v1255
        %v1284 = vmul.f32 %v1281, %v1260
        %v1285 = vadd.f32 %v1181, %v1283
        %v1286 = vadd.f32 %v1182, %v1284
        %s1287 = scalar_lea.vmem %s4, 32
        %v1288 = vld [vmem:[%s1287] sm:$0xf]
        %v1290 = vsel %vm452, %v1288, 0
        %1292 = vmatprep.subr.mxu0 0.0
        %1293 = vmatpush1.msra.mxu0 %v1290
        %1294 = vmatprep.subr.mxu0 0.0
        %1295 = vmatpush1.msra.mxu0 0.0
        %1296 = vmatprep.subr.mxu0 0.0
        %1297 = vmatpush1.msra.mxu0 0.0
        %1298 = vmatprep.subr.mxu0 0.0
        %1299 = vmatpush1.msra.mxu0 0.0
        %1300 = vmatprep.subr.mxu0 0.0
        %1301 = vmatpush1.msra.mxu0 0.0
        %1302 = vmatprep.subr.mxu0 0.0
        %1303 = vmatpush1.msra.mxu0 0.0
        %1304 = vmatprep.subr.mxu0 0.0
        %1305 = vmatpush1.msra.mxu0 0.0
        %1306 = vmatprep.subr.mxu0 0.0
        %1307 = vmatpush1.msra.mxu0 0.0
        %1308 = vmatprep.subr.mxu0 0.0
        %1309 = vmatpush1.msra.mxu0 0.0
        %1310 = vmatprep.subr.mxu0 0.0
        %1311 = vmatpush1.msra.mxu0 0.0
        %1312 = vmatprep.subr.mxu0 0.0
        %1313 = vmatpush1.msra.mxu0 0.0
        %1314 = vmatprep.subr.mxu0 0.0
        %1315 = vmatpush1.msra.mxu0 0.0
        %1316 = vmatprep.subr.mxu0 0.0
        %1317 = vmatpush1.msra.mxu0 0.0
        %1318 = vmatprep.subr.mxu0 0.0
        %1319 = vmatpush1.msra.mxu0 0.0
        %1320 = vmatprep.subr.mxu0 0.0
        %1321 = vmatpush1.msra.mxu0 0.0
        %1322 = vmatprep.subr.mxu0 0.0
        %1323 = vmatpush1.msra.mxu0 0.0
        %1324 = vmatprep.subr.mxu0 0.0
        %1325 = vmatpush1.msra.mxu0 0.0
        %1326 = vmatprep.subr.mxu0 0.0
        %1327 = vmatpush1.msra.mxu0 0.0
        %1328 = vmatprep.subr.mxu0 0.0
        %1329 = vmatpush1.msra.mxu0 0.0
        %1330 = vmatprep.subr.mxu0 0.0
        %1331 = vmatpush1.msra.mxu0 0.0
        %1332 = vmatprep.subr.mxu0 0.0
        %1333 = vmatpush1.msra.mxu0 0.0
        %1334 = vmatprep.subr.mxu0 0.0
        %1335 = vmatpush1.msra.mxu0 0.0
        %1336 = vmatprep.subr.mxu0 0.0
        %1337 = vmatpush1.msra.mxu0 0.0
        %1338 = vmatprep.subr.mxu0 0.0
        %1339 = vmatpush1.msra.mxu0 0.0
        %1340 = vmatprep.subr.mxu0 0.0
        %1341 = vmatpush1.msra.mxu0 0.0
        %1342 = vmatprep.subr.mxu0 0.0
        %1343 = vmatpush1.msra.mxu0 0.0
        %1344 = vmatprep.subr.mxu0 0.0
        %1345 = vmatpush1.msra.mxu0 0.0
        %1346 = vmatprep.subr.mxu0 0.0
        %1347 = vmatpush1.msra.mxu0 0.0
        %1348 = vmatprep.subr.mxu0 0.0
        %1349 = vmatpush1.msra.mxu0 0.0
        %1350 = vmatprep.subr.mxu0 0.0
        %1351 = vmatpush1.msra.mxu0 0.0
        %1352 = vmatprep.subr.mxu0 0.0
        %1353 = vmatpush1.msra.mxu0 0.0
        %1354 = vmatprep.subr.mxu0 0.0
        %1355 = vmatpush1.msra.mxu0 0.0
        %1356 = vmatprep.mubr.f32.mxu0 0.0
        %1357 = vmatmul.mubr.f32.gmra.mrb[0].mxu0 %v447
        %v1358 = vpop.f32.mrb[0].mxu0
        %v1359 = vadd.f32 0.0, %v1358
        %v1360 = vpop.f32.mrb[0].mxu0
        %1361 = vmatprep.mubr.f32.mxu0 0.0
        %1362 = vmatmul.mubr.f32.gmra.mrb[0].mxu0 %v450
        %v1363 = vpop.f32.mrb[0].mxu0
        %v1364 = vadd.f32 0.0, %v1363
        %v1365 = vpop.f32.mrb[0].mxu0
        %1366 = vdwg.mxu0
        %1367 = vset.pattern.permute.xlu0 8
        %1368 = vperm.xlu0 %1367, %v440
        %v1369 = vpop.permute.xlu0 %1368
        %1371 = vset.pattern.permute.xlu0 8
        %1372 = vperm.xlu0 %1371, %v441
        %v1373 = vpop.permute.xlu0 %1372
        %v1375 = vmul.f32 %v1369, %v1359
        %v1376 = vmul.f32 %v1373, %v1364
        %v1377 = vadd.f32 %v1273, %v1375
        %v1378 = vadd.f32 %v1274, %v1376
        %1379 = vset.pattern.permute.xlu0 8
        %1380 = vperm.xlu0 %1379, %v442
        %v1381 = vpop.permute.xlu0 %1380
        %1383 = vset.pattern.permute.xlu0 8
        %1384 = vperm.xlu0 %1383, %v443
        %v1385 = vpop.permute.xlu0 %1384
        %v1387 = vmul.f32 %v1381, %v1359
        %v1388 = vmul.f32 %v1385, %v1364
        %v1389 = vadd.f32 %v1285, %v1387
        %v1390 = vadd.f32 %v1286, %v1388
        %s1391 = scalar_lea.vmem %s4, 36
        %v1392 = vld [vmem:[%s1391] sm:$0xf]
        %v1394 = vsel %vm452, %v1392, 0
        %1396 = vmatprep.subr.mxu0 0.0
        %1397 = vmatpush1.msra.mxu0 %v1394
        %1398 = vmatprep.subr.mxu0 0.0
        %1399 = vmatpush1.msra.mxu0 0.0
        %1400 = vmatprep.subr.mxu0 0.0
        %1401 = vmatpush1.msra.mxu0 0.0
        %1402 = vmatprep.subr.mxu0 0.0
        %1403 = vmatpush1.msra.mxu0 0.0
        %1404 = vmatprep.subr.mxu0 0.0
        %1405 = vmatpush1.msra.mxu0 0.0
        %1406 = vmatprep.subr.mxu0 0.0
        %1407 = vmatpush1.msra.mxu0 0.0
        %1408 = vmatprep.subr.mxu0 0.0
        %1409 = vmatpush1.msra.mxu0 0.0
        %1410 = vmatprep.subr.mxu0 0.0
        %1411 = vmatpush1.msra.mxu0 0.0
        %1412 = vmatprep.subr.mxu0 0.0
        %1413 = vmatpush1.msra.mxu0 0.0
        %1414 = vmatprep.subr.mxu0 0.0
        %1415 = vmatpush1.msra.mxu0 0.0
        %1416 = vmatprep.subr.mxu0 0.0
        %1417 = vmatpush1.msra.mxu0 0.0
        %1418 = vmatprep.subr.mxu0 0.0
        %1419 = vmatpush1.msra.mxu0 0.0
        %1420 = vmatprep.subr.mxu0 0.0
        %1421 = vmatpush1.msra.mxu0 0.0
        %1422 = vmatprep.subr.mxu0 0.0
        %1423 = vmatpush1.msra.mxu0 0.0
        %1424 = vmatprep.subr.mxu0 0.0
        %1425 = vmatpush1.msra.mxu0 0.0
        %1426 = vmatprep.subr.mxu0 0.0
        %1427 = vmatpush1.msra.mxu0 0.0
        %1428 = vmatprep.subr.mxu0 0.0
        %1429 = vmatpush1.msra.mxu0 0.0
        %1430 = vmatprep.subr.mxu0 0.0
        %1431 = vmatpush1.msra.mxu0 0.0
        %1432 = vmatprep.subr.mxu0 0.0
        %1433 = vmatpush1.msra.mxu0 0.0
        %1434 = vmatprep.subr.mxu0 0.0
        %1435 = vmatpush1.msra.mxu0 0.0
        %1436 = vmatprep.subr.mxu0 0.0
        %1437 = vmatpush1.msra.mxu0 0.0
        %1438 = vmatprep.subr.mxu0 0.0
        %1439 = vmatpush1.msra.mxu0 0.0
        %1440 = vmatprep.subr.mxu0 0.0
        %1441 = vmatpush1.msra.mxu0 0.0
        %1442 = vmatprep.subr.mxu0 0.0
        %1443 = vmatpush1.msra.mxu0 0.0
        %1444 = vmatprep.subr.mxu0 0.0
        %1445 = vmatpush1.msra.mxu0 0.0
        %1446 = vmatprep.subr.mxu0 0.0
        %1447 = vmatpush1.msra.mxu0 0.0
        %1448 = vmatprep.subr.mxu0 0.0
        %1449 = vmatpush1.msra.mxu0 0.0
        %1450 = vmatprep.subr.mxu0 0.0
        %1451 = vmatpush1.msra.mxu0 0.0
        %1452 = vmatprep.subr.mxu0 0.0
        %1453 = vmatpush1.msra.mxu0 0.0
        %1454 = vmatprep.subr.mxu0 0.0
        %1455 = vmatpush1.msra.mxu0 0.0
        %1456 = vmatprep.subr.mxu0 0.0
        %1457 = vmatpush1.msra.mxu0 0.0
        %1458 = vmatprep.subr.mxu0 0.0
        %1459 = vmatpush1.msra.mxu0 0.0
        %1460 = vmatprep.mubr.f32.mxu0 0.0
        %1461 = vmatmul.mubr.f32.gmra.mrb[0].mxu0 %v447
        %v1462 = vpop.f32.mrb[0].mxu0
        %v1463 = vadd.f32 0.0, %v1462
        %v1464 = vpop.f32.mrb[0].mxu0
        %1465 = vmatprep.mubr.f32.mxu0 0.0
        %1466 = vmatmul.mubr.f32.gmra.mrb[0].mxu0 %v450
        %v1467 = vpop.f32.mrb[0].mxu0
        %v1468 = vadd.f32 0.0, %v1467
        %v1469 = vpop.f32.mrb[0].mxu0
        %1470 = vdwg.mxu0
        %1471 = vset.pattern.permute.xlu0 9
        %1472 = vperm.xlu0 %1471, %v440
        %v1473 = vpop.permute.xlu0 %1472
        %1475 = vset.pattern.permute.xlu0 9
        %1476 = vperm.xlu0 %1475, %v441
        %v1477 = vpop.permute.xlu0 %1476
        %v1479 = vmul.f32 %v1473, %v1463
        %v1480 = vmul.f32 %v1477, %v1468
        %v1481 = vadd.f32 %v1377, %v1479
        %v1482 = vadd.f32 %v1378, %v1480
        %1483 = vset.pattern.permute.xlu0 9
        %1484 = vperm.xlu0 %1483, %v442
        %v1485 = vpop.permute.xlu0 %1484
        %1487 = vset.pattern.permute.xlu0 9
        %1488 = vperm.xlu0 %1487, %v443
        %v1489 = vpop.permute.xlu0 %1488
        %v1491 = vmul.f32 %v1485, %v1463
        %v1492 = vmul.f32 %v1489, %v1468
        %v1493 = vadd.f32 %v1389, %v1491
        %v1494 = vadd.f32 %v1390, %v1492
        %s1495 = scalar_lea.vmem %s4, 40
        %v1496 = vld [vmem:[%s1495] sm:$0xf]
        %v1498 = vsel %vm452, %v1496, 0
        %1500 = vmatprep.subr.mxu0 0.0
        %1501 = vmatpush1.msra.mxu0 %v1498
        %1502 = vmatprep.subr.mxu0 0.0
        %1503 = vmatpush1.msra.mxu0 0.0
        %1504 = vmatprep.subr.mxu0 0.0
        %1505 = vmatpush1.msra.mxu0 0.0
        %1506 = vmatprep.subr.mxu0 0.0
        %1507 = vmatpush1.msra.mxu0 0.0
        %1508 = vmatprep.subr.mxu0 0.0
        %1509 = vmatpush1.msra.mxu0 0.0
        %1510 = vmatprep.subr.mxu0 0.0
        %1511 = vmatpush1.msra.mxu0 0.0
        %1512 = vmatprep.subr.mxu0 0.0
        %1513 = vmatpush1.msra.mxu0 0.0
        %1514 = vmatprep.subr.mxu0 0.0
        %1515 = vmatpush1.msra.mxu0 0.0
        %1516 = vmatprep.subr.mxu0 0.0
        %1517 = vmatpush1.msra.mxu0 0.0
        %1518 = vmatprep.subr.mxu0 0.0
        %1519 = vmatpush1.msra.mxu0 0.0
        %1520 = vmatprep.subr.mxu0 0.0
        %1521 = vmatpush1.msra.mxu0 0.0
        %1522 = vmatprep.subr.mxu0 0.0
        %1523 = vmatpush1.msra.mxu0 0.0
        %1524 = vmatprep.subr.mxu0 0.0
        %1525 = vmatpush1.msra.mxu0 0.0
        %1526 = vmatprep.subr.mxu0 0.0
        %1527 = vmatpush1.msra.mxu0 0.0
        %1528 = vmatprep.subr.mxu0 0.0
        %1529 = vmatpush1.msra.mxu0 0.0
        %1530 = vmatprep.subr.mxu0 0.0
        %1531 = vmatpush1.msra.mxu0 0.0
        %1532 = vmatprep.subr.mxu0 0.0
        %1533 = vmatpush1.msra.mxu0 0.0
        %1534 = vmatprep.subr.mxu0 0.0
        %1535 = vmatpush1.msra.mxu0 0.0
        %1536 = vmatprep.subr.mxu0 0.0
        %1537 = vmatpush1.msra.mxu0 0.0
        %1538 = vmatprep.subr.mxu0 0.0
        %1539 = vmatpush1.msra.mxu0 0.0
        %1540 = vmatprep.subr.mxu0 0.0
        %1541 = vmatpush1.msra.mxu0 0.0
        %1542 = vmatprep.subr.mxu0 0.0
        %1543 = vmatpush1.msra.mxu0 0.0
        %1544 = vmatprep.subr.mxu0 0.0
        %1545 = vmatpush1.msra.mxu0 0.0
        %1546 = vmatprep.subr.mxu0 0.0
        %1547 = vmatpush1.msra.mxu0 0.0
        %1548 = vmatprep.subr.mxu0 0.0
        %1549 = vmatpush1.msra.mxu0 0.0
        %1550 = vmatprep.subr.mxu0 0.0
        %1551 = vmatpush1.msra.mxu0 0.0
        %1552 = vmatprep.subr.mxu0 0.0
        %1553 = vmatpush1.msra.mxu0 0.0
        %1554 = vmatprep.subr.mxu0 0.0
        %1555 = vmatpush1.msra.mxu0 0.0
        %1556 = vmatprep.subr.mxu0 0.0
        %1557 = vmatpush1.msra.mxu0 0.0
        %1558 = vmatprep.subr.mxu0 0.0
        %1559 = vmatpush1.msra.mxu0 0.0
        %1560 = vmatprep.subr.mxu0 0.0
        %1561 = vmatpush1.msra.mxu0 0.0
        %1562 = vmatprep.subr.mxu0 0.0
        %1563 = vmatpush1.msra.mxu0 0.0
        %1564 = vmatprep.mubr.f32.mxu0 0.0
        %1565 = vmatmul.mubr.f32.gmra.mrb[0].mxu0 %v447
        %v1566 = vpop.f32.mrb[0].mxu0
        %v1567 = vadd.f32 0.0, %v1566
        %v1568 = vpop.f32.mrb[0].mxu0
        %1569 = vmatprep.mubr.f32.mxu0 0.0
        %1570 = vmatmul.mubr.f32.gmra.mrb[0].mxu0 %v450
        %v1571 = vpop.f32.mrb[0].mxu0
        %v1572 = vadd.f32 0.0, %v1571
        %v1573 = vpop.f32.mrb[0].mxu0
        %1574 = vdwg.mxu0
        %1575 = vset.pattern.permute.xlu0 10
        %1576 = vperm.xlu0 %1575, %v440
        %v1577 = vpop.permute.xlu0 %1576
        %1579 = vset.pattern.permute.xlu0 10
        %1580 = vperm.xlu0 %1579, %v441
        %v1581 = vpop.permute.xlu0 %1580
        %v1583 = vmul.f32 %v1577, %v1567
        %v1584 = vmul.f32 %v1581, %v1572
        %v1585 = vadd.f32 %v1481, %v1583
        %v1586 = vadd.f32 %v1482, %v1584
        %1587 = vset.pattern.permute.xlu0 10
        %1588 = vperm.xlu0 %1587, %v442
        %v1589 = vpop.permute.xlu0 %1588
        %1591 = vset.pattern.permute.xlu0 10
        %1592 = vperm.xlu0 %1591, %v443
        %v1593 = vpop.permute.xlu0 %1592
        %v1595 = vmul.f32 %v1589, %v1567
        %v1596 = vmul.f32 %v1593, %v1572
        %v1597 = vadd.f32 %v1493, %v1595
        %v1598 = vadd.f32 %v1494, %v1596
        %s1599 = scalar_lea.vmem %s4, 44
        %v1600 = vld [vmem:[%s1599] sm:$0xf]
        %v1602 = vsel %vm452, %v1600, 0
        %1604 = vmatprep.subr.mxu0 0.0
        %1605 = vmatpush1.msra.mxu0 %v1602
        %1606 = vmatprep.subr.mxu0 0.0
        %1607 = vmatpush1.msra.mxu0 0.0
        %1608 = vmatprep.subr.mxu0 0.0
        %1609 = vmatpush1.msra.mxu0 0.0
        %1610 = vmatprep.subr.mxu0 0.0
        %1611 = vmatpush1.msra.mxu0 0.0
        %1612 = vmatprep.subr.mxu0 0.0
        %1613 = vmatpush1.msra.mxu0 0.0
        %1614 = vmatprep.subr.mxu0 0.0
        %1615 = vmatpush1.msra.mxu0 0.0
        %1616 = vmatprep.subr.mxu0 0.0
        %1617 = vmatpush1.msra.mxu0 0.0
        %1618 = vmatprep.subr.mxu0 0.0
        %1619 = vmatpush1.msra.mxu0 0.0
        %1620 = vmatprep.subr.mxu0 0.0
        %1621 = vmatpush1.msra.mxu0 0.0
        %1622 = vmatprep.subr.mxu0 0.0
        %1623 = vmatpush1.msra.mxu0 0.0
        %1624 = vmatprep.subr.mxu0 0.0
        %1625 = vmatpush1.msra.mxu0 0.0
        %1626 = vmatprep.subr.mxu0 0.0
        %1627 = vmatpush1.msra.mxu0 0.0
        %1628 = vmatprep.subr.mxu0 0.0
        %1629 = vmatpush1.msra.mxu0 0.0
        %1630 = vmatprep.subr.mxu0 0.0
        %1631 = vmatpush1.msra.mxu0 0.0
        %1632 = vmatprep.subr.mxu0 0.0
        %1633 = vmatpush1.msra.mxu0 0.0
        %1634 = vmatprep.subr.mxu0 0.0
        %1635 = vmatpush1.msra.mxu0 0.0
        %1636 = vmatprep.subr.mxu0 0.0
        %1637 = vmatpush1.msra.mxu0 0.0
        %1638 = vmatprep.subr.mxu0 0.0
        %1639 = vmatpush1.msra.mxu0 0.0
        %1640 = vmatprep.subr.mxu0 0.0
        %1641 = vmatpush1.msra.mxu0 0.0
        %1642 = vmatprep.subr.mxu0 0.0
        %1643 = vmatpush1.msra.mxu0 0.0
        %1644 = vmatprep.subr.mxu0 0.0
        %1645 = vmatpush1.msra.mxu0 0.0
        %1646 = vmatprep.subr.mxu0 0.0
        %1647 = vmatpush1.msra.mxu0 0.0
        %1648 = vmatprep.subr.mxu0 0.0
        %1649 = vmatpush1.msra.mxu0 0.0
        %1650 = vmatprep.subr.mxu0 0.0
        %1651 = vmatpush1.msra.mxu0 0.0
        %1652 = vmatprep.subr.mxu0 0.0
        %1653 = vmatpush1.msra.mxu0 0.0
        %1654 = vmatprep.subr.mxu0 0.0
        %1655 = vmatpush1.msra.mxu0 0.0
        %1656 = vmatprep.subr.mxu0 0.0
        %1657 = vmatpush1.msra.mxu0 0.0
        %1658 = vmatprep.subr.mxu0 0.0
        %1659 = vmatpush1.msra.mxu0 0.0
        %1660 = vmatprep.subr.mxu0 0.0
        %1661 = vmatpush1.msra.mxu0 0.0
        %1662 = vmatprep.subr.mxu0 0.0
        %1663 = vmatpush1.msra.mxu0 0.0
        %1664 = vmatprep.subr.mxu0 0.0
        %1665 = vmatpush1.msra.mxu0 0.0
        %1666 = vmatprep.subr.mxu0 0.0
        %1667 = vmatpush1.msra.mxu0 0.0
        %1668 = vmatprep.mubr.f32.mxu0 0.0
        %1669 = vmatmul.mubr.f32.gmra.mrb[0].mxu0 %v447
        %v1670 = vpop.f32.mrb[0].mxu0
        %v1671 = vadd.f32 0.0, %v1670
        %v1672 = vpop.f32.mrb[0].mxu0
        %1673 = vmatprep.mubr.f32.mxu0 0.0
        %1674 = vmatmul.mubr.f32.gmra.mrb[0].mxu0 %v450
        %v1675 = vpop.f32.mrb[0].mxu0
        %v1676 = vadd.f32 0.0, %v1675
        %v1677 = vpop.f32.mrb[0].mxu0
        %1678 = vdwg.mxu0
        %1679 = vset.pattern.permute.xlu0 11
        %1680 = vperm.xlu0 %1679, %v440
        %v1681 = vpop.permute.xlu0 %1680
        %1683 = vset.pattern.permute.xlu0 11
        %1684 = vperm.xlu0 %1683, %v441
        %v1685 = vpop.permute.xlu0 %1684
        %v1687 = vmul.f32 %v1681, %v1671
        %v1688 = vmul.f32 %v1685, %v1676
        %v1689 = vadd.f32 %v1585, %v1687
        %v1690 = vadd.f32 %v1586, %v1688
        %1691 = vset.pattern.permute.xlu0 11
        %1692 = vperm.xlu0 %1691, %v442
        %v1693 = vpop.permute.xlu0 %1692
        %1695 = vset.pattern.permute.xlu0 11
        %1696 = vperm.xlu0 %1695, %v443
        %v1697 = vpop.permute.xlu0 %1696
        %v1699 = vmul.f32 %v1693, %v1671
        %v1700 = vmul.f32 %v1697, %v1676
        %v1701 = vadd.f32 %v1597, %v1699
        %v1702 = vadd.f32 %v1598, %v1700
        %v1703 = vld [vmem:[%s429] sm:$0x1]
        %v1704 = vlaneseq
        %v1705 = vshrl.u32 %v1704, 7
        %v1706 = vlaneseq
        %v1707 = vshrl.u32 %v1706, 7
        %v1708 = vsub.s32 0, %v1707
        %v1709 = vrot.slane %v1703, %v1708
        %vm1710 = vcmp.eq.s32.totalorder %v1705, %v1709
        %v1711 = vsel %vm1710, 1, 0
        %v1712 = vcvt.s32.f32 %v1711
        %v1713 = vld [vmem:[%s394] sm:$0xff]
        %v1714 = vld [vmem:[%s394 + $0x8] sm:$0xff]
        %vm1715 = vcmask 130048
        %v1717 = vsel %vm1715, %v1712, 0
        %1719 = vmatprep.subr.mxu0 %v1701
        %1720 = vmatpush1.msra.mxu0 %v1689
        %1721 = vmatprep.subr.mxu0 %v1702
        %1722 = vmatpush1.msra.mxu0 %v1690
        %1723 = vmatprep.subr.mxu0 0.0
        %1724 = vmatpush1.msra.mxu0 0.0
        %1725 = vmatprep.subr.mxu0 0.0
        %1726 = vmatpush1.msra.mxu0 0.0
        %1727 = vmatprep.subr.mxu0 0.0
        %1728 = vmatpush1.msra.mxu0 0.0
        %1729 = vmatprep.subr.mxu0 0.0
        %1730 = vmatpush1.msra.mxu0 0.0
        %1731 = vmatprep.subr.mxu0 0.0
        %1732 = vmatpush1.msra.mxu0 0.0
        %1733 = vmatprep.subr.mxu0 0.0
        %1734 = vmatpush1.msra.mxu0 0.0
        %1735 = vmatprep.subr.mxu0 0.0
        %1736 = vmatpush1.msra.mxu0 0.0
        %1737 = vmatprep.subr.mxu0 0.0
        %1738 = vmatpush1.msra.mxu0 0.0
        %1739 = vmatprep.subr.mxu0 0.0
        %1740 = vmatpush1.msra.mxu0 0.0
        %1741 = vmatprep.subr.mxu0 0.0
        %1742 = vmatpush1.msra.mxu0 0.0
        %1743 = vmatprep.subr.mxu0 0.0
        %1744 = vmatpush1.msra.mxu0 0.0
        %1745 = vmatprep.subr.mxu0 0.0
        %1746 = vmatpush1.msra.mxu0 0.0
        %1747 = vmatprep.subr.mxu0 0.0
        %1748 = vmatpush1.msra.mxu0 0.0
        %1749 = vmatprep.subr.mxu0 0.0
        %1750 = vmatpush1.msra.mxu0 0.0
        %1751 = vmatprep.subr.mxu0 0.0
        %1752 = vmatpush1.msra.mxu0 0.0
        %1753 = vmatprep.subr.mxu0 0.0
        %1754 = vmatpush1.msra.mxu0 0.0
        %1755 = vmatprep.subr.mxu0 0.0
        %1756 = vmatpush1.msra.mxu0 0.0
        %1757 = vmatprep.subr.mxu0 0.0
        %1758 = vmatpush1.msra.mxu0 0.0
        %1759 = vmatprep.subr.mxu0 0.0
        %1760 = vmatpush1.msra.mxu0 0.0
        %1761 = vmatprep.subr.mxu0 0.0
        %1762 = vmatpush1.msra.mxu0 0.0
        %1763 = vmatprep.subr.mxu0 0.0
        %1764 = vmatpush1.msra.mxu0 0.0
        %1765 = vmatprep.subr.mxu0 0.0
        %1766 = vmatpush1.msra.mxu0 0.0
        %1767 = vmatprep.subr.mxu0 0.0
        %1768 = vmatpush1.msra.mxu0 0.0
        %1769 = vmatprep.subr.mxu0 0.0
        %1770 = vmatpush1.msra.mxu0 0.0
        %1771 = vmatprep.subr.mxu0 0.0
        %1772 = vmatpush1.msra.mxu0 0.0
        %1773 = vmatprep.subr.mxu0 0.0
        %1774 = vmatpush1.msra.mxu0 0.0
        %1775 = vmatprep.subr.mxu0 0.0
        %1776 = vmatpush1.msra.mxu0 0.0
        %1777 = vmatprep.subr.mxu0 0.0
        %1778 = vmatpush1.msra.mxu0 0.0
        %1779 = vmatprep.subr.mxu0 0.0
        %1780 = vmatpush1.msra.mxu0 0.0
        %1781 = vmatprep.subr.mxu0 0.0
        %1782 = vmatpush1.msra.mxu0 0.0
        %1783 = vmatprep.mubr.f32.mxu0 0.0
        %1784 = vmatmul.mubr.f32.gmra.mrb[0].mxu0 %v1717
        %v1785 = vpop.f32.mrb[0].mxu0
        %v1786 = vadd.f32 0.0, %v1785
        %v1787 = vpop.f32.mrb[0].mxu0
        %v1788 = vadd.f32 0.0, %v1787
        %1789 = vdwg.mxu0
        %v1790 = vadd.f32 %v1713, %v1786
        %v1791 = vadd.f32 %v1714, %v1788
        %1792 = vst [vmem:[%s394] sm:$0xff] %v1790
        %1793 = vst [vmem:[%s394 + $0x8] sm:$0xff] %v1791
        %p1794 = scmp.eq.s32.totalorder %s27, 3
        // Predicated region
        $region57: #{tpu_custom_call.1} parent=51 // pred_check
          %p1795 = pneg %p1794
        $region58: #{tpu_custom_call.1} parent=51 // pred_check_branch
          %1797 = sbr.rel (%p1795) target = $region60
        $region59: #{tpu_custom_call.1} parent=51 // pred_region
          %v1798 = vld [vmem:[%s394] sm:$0xff]
          %v1799 = vld [vmem:[%s394 + $0x8] sm:$0xff]
          %v1800 = vld [vmem:[%s5] sm:$0x1]
          %v1801 = vld [vmem:[%s6] sm:$0x1]
          %v1803 = vlaneseq
          %v1804 = vshrl.u32 %v1803, 7
          %v1805 = vsub.s32 0, %v1804
          %v1806 = vrot.slane %v1800, %v1805
          %v1808 = vmul.f32 %v1798, %v1806
          %v1810 = vlaneseq
          %v1811 = vshrl.u32 %v1810, 7
          %v1812 = vsub.s32 0, %v1811
          %v1813 = vrot.slane %v1801, %v1812
          %v1815 = vmul.f32 %v1799, %v1813
          %v1816 = vsub.f32 %v1808, %v1815
          %v1817 = vmul.f32 %v1798, %v1813
          %v1818 = vmul.f32 %v1799, %v1806
          %v1819 = vadd.f32 %v1817, %v1818
          %v1820 = vmul.f32 %v1816, %v1816
          %v1821 = vmul.f32 %v1819, %v1819
          %v1822 = vadd.f32 %v1820, %v1821
          %v1823 = vrsqrt.pop %v1822
          %v1824 = vmul.f32 %v1822, %v1823
          %vm1825 = vcmp.eq.f32.partialorder %v1822, inf
          %v1826 = vsel %vm1825, %v1822, %v1824
          %vm1827 = vcmp.eq.f32.partialorder %v1822, 0.0
          %v1828 = vand.u32 %v1822, 2147483648
          %v1829 = vsel %vm1827, %v1828, %v1826
          %v1830 = vadd.f32 %v1829, 1e-06
          %v1831 = vrcp.pop %v1830
          %v1832 = vld [vmem:[%s7] sm:$0x1]
          %v1834 = vlaneseq
          %v1835 = vshrl.u32 %v1834, 7
          %v1836 = vsub.s32 0, %v1835
          %v1837 = vrot.slane %v1832, %v1836
          %v1839 = vadd.f32 %v1829, %v1837
          %v1840 = vmax.f32 %v1839, 0.0
          %v1841 = vmul.f32 %v1840, %v1831
          %v1842 = vmul.f32 %v1816, %v1841
          %v1843 = vmul.f32 %v1819, %v1841
          %1844 = vst [vmem:[%s394] sm:$0xff] %v1842
          %1845 = vst [vmem:[%s394 + $0x8] sm:$0xff] %v1843
        $region60: #{tpu_custom_call.1} parent=51 // pred_fallthru
          _
        %s1846 = sand.u32 %s246, 1
        %s1847 = scalar_lea.sflag [#allocation3], %s1846
        %s1848 = sand.u32 %s246, 1
        %s1849 = smul.addr %s1848, 16
        %s1850 = scalar_lea.vmem [#allocation2], %s1849
        // Predicated region
        $region61: #{tpu_custom_call.1} parent=51 // pred_check
          %p1851 = pneg %p256
        $region62: #{tpu_custom_call.1} parent=51 // pred_check_branch
          %1853 = sbr.rel (%p1851) target = $region64
        $region63: #{tpu_custom_call.1} parent=51 // pred_region
          %s1855 = ssub.s32 256, 256
          %1856 = vsyncadd %s1847, %s1855
          %s1857 = smul.addr %s26, 2
          %s1858 = smul.addr %s1857, 128
          %s1859 = scalar_lea.hbm %s8, %s1858
          %s1861 = sshll.u32 %s1850, 4
          %s1862 = int_to_ptr.vmem [resolvable:$true] %s1861
          %1864 = dma.vmem_to_hbm [thread:$0]  %s1862, 256, %s1859, %s1847
        $region64: #{tpu_custom_call.1} parent=51 // pred_fallthru
          _
      $region52: #{tpu_custom_call.1} parent=5 // pred_fallthru
        _
      %p1865 = scmp.le.s32.totalorder 2, %s17
      // Predicated region
      $region65: #{tpu_custom_call.1} parent=5 // pred_check
        %p1866 = pneg %p1865
      $region66: #{tpu_custom_call.1} parent=5 // pred_check_branch
        %1868 = sbr.rel (%p1866) target = $region68
      $region67: #{tpu_custom_call.1} parent=5 // pred_region
        %s1869 = ssub.s32 %s17, 2
        // Predicated region
        $region69: #{tpu_custom_call.1} parent=67 // pred_check
          %p1870 = pneg %p262
        $region70: #{tpu_custom_call.1} parent=67 // pred_check_branch
          %1872 = sbr.rel (%p1870) target = $region72
        $region71: #{tpu_custom_call.1} parent=67 // pred_region
          %s1873 = sand.u32 %s247, 1
          %s1874 = scalar_lea.sflag [#allocation3], %s1873
          %s1875 = sand.u32 %s247, 1
          %s1876 = smul.addr %s1875, 16
          %s1877 = scalar_lea.vmem [#allocation2], %s1876
          %1878 = dma.done %s1874, 256
        $region72: #{tpu_custom_call.1} parent=67 // pred_fallthru
          _
      $region68: #{tpu_custom_call.1} parent=5 // pred_fallthru
        _
    $region6: #{tpu_custom_call.1} parent=1 // loop_footer
      %s21 = sadd.s32 1, %s17
    $region7: #{tpu_custom_call.1} parent=1 // loop_footer_branch
      %16 = sbr.rel target = $region3
    $region8: #{tpu_custom_call.1} parent=1 // loop_exit
      _
    %1879 = vsyncpa [#allocation3], 1
    %s1880 = scalar_lea.sflag [#allocation3], 1
    %1881 = vsyncpa %s1880, 1

</llo_original>
